<compile_context>
chip_gen: v5e
topology: v5e:2x2
jax: 0.10.0
libtpu: 0.0.40
codegen_flags: <defaults>
</compile_context>

<pallas_src>
import jax
import jax.numpy as jnp
from jax import lax
from jax.experimental import pallas as pl
from jax.experimental.pallas import tpu as pltpu

HIDDEN = 64          # embed_size must be 64 to feed GRU(64, 64)
LEAKY_SLOPE = 0.01   # PyTorch nn.LeakyReLU default


def _leaky_relu(x):
    return jnp.where(x > 0, x, LEAKY_SLOPE * x)


def _round_up(x, m):
    return ((x + m - 1) // m) * m


def _make_kernel(seq_len, t_blk, b_blk, v_pad):
    H = HIDDEN
    G = 3 * H          # gates r|z|n
    M = t_blk * b_blk

    def kernel(ids_ref,           # (t_blk, b_blk) int32 token ids for this block
               gtab_ref,          # (v_pad, 3H) = embedding @ W_ih^T + b_ih (folded)
               whh_ref,           # (H, 3H) = GRU weight_hh_l0.T
               bhh_ref,           # (1, 3H)
               w1_ref, b1_ref,    # (H, 256), (1, 256)
               w2_ref, b2_ref,    # (256, 128), (1, 128)
               w3_ref, b3_ref,    # (128, H), (1, H)
               w4_ref, b4_ref,    # (1, H), (1, 1)
               out_ref,           # (b_blk, 1)
               h_ref,             # VMEM scratch (b_blk, H): persistent hidden state
               gi_ref):           # VMEM scratch (M, 3H): per-block input projection
        t_idx = pl.program_id(1)

        @pl.when(t_idx == 0)
        def _init():
            h_ref[...] = jnp.zeros_like(h_ref)

        # ---- embedding + input-projection fold: exact one-hot row gather on the MXU,
        #      one batched matmul per time block (off the serial recurrence path) ----
        ids = ids_ref[...]                                              # (t_blk, b_blk)
        iota_v = lax.broadcasted_iota(jnp.int32, (t_blk, b_blk, v_pad), 2)
        onehot = (ids[:, :, None] == iota_v).astype(jnp.float32)
        onehot = onehot.reshape(M, v_pad)
        gi_ref[...] = jnp.dot(onehot, gtab_ref[...],
                              preferred_element_type=jnp.float32)       # (M, 3H)

        whh = whh_ref[...]
        bhh = jnp.broadcast_to(bhh_ref[...], (b_blk, G))   # hoisted loop constant
        t_base = t_idx * t_blk

        def gru_step(lt, h):
            row = pl.multiple_of(lt * b_blk, b_blk)
            gi_t = gi_ref[pl.ds(row, b_blk), :]                      # (b_blk, 3H)
            gh = jnp.dot(h, whh, preferred_element_type=jnp.float32) + bhh
            # fused, lane-aligned sigmoid over r|z (first 128 lanes)
            rz = jax.nn.sigmoid(gi_t[:, :2 * H] + gh[:, :2 * H])
            r, z = rz[:, :H], rz[:, H:]
            n = jnp.tanh(gi_t[:, 2 * H:] + r * gh[:, 2 * H:])
            h_new = (1.0 - z) * n + z * h
            if seq_len % t_blk == 0:       # trace-time: no padded steps exist
                return h_new
            # mask padded time steps (keeps h unchanged past the true seq end)
            keep = (t_base + lt < seq_len).astype(jnp.float32)
            return keep * h_new + (1.0 - keep) * h

        h = lax.fori_loop(0, t_blk, gru_step, h_ref[...], unroll=8)
        h_ref[...] = h

        # ---- MLP head, only on the last time block ----
        @pl.when(t_idx == pl.num_programs(1) - 1)
        def _head():
            y = _leaky_relu(
                jnp.dot(h, w1_ref[...], preferred_element_type=jnp.float32)
                + b1_ref[...])
            y = _leaky_relu(
                jnp.dot(y, w2_ref[...], preferred_element_type=jnp.float32)
                + b2_ref[...])
            y = _leaky_relu(
                jnp.dot(y, w3_ref[...], preferred_element_type=jnp.float32)
                + b3_ref[...])
            # final (64 -> 1): VPU multiply + lane reduction, no 1-wide MXU pass
            logit = jnp.sum(y * w4_ref[...], axis=-1, keepdims=True) + b4_ref[...]
            out_ref[...] = jax.nn.sigmoid(logit).astype(out_ref.dtype)

    return kernel


def sym_discriminator(sym, params, *, t_block=128):
    """sym: (B, T) int32 token ids -> (B, 1) float32 probabilities."""
    B, T = sym.shape
    H = HIDDEN
    vocab = params["embedding"].shape[0]
    assert params["embedding"].shape[1] == H, "GRU input size is 64, so embed_size must be 64"

    # ---- fold embedding + GRU input projection + b_ih into one small resident table ----
    gi_table = (params["embedding"].astype(jnp.float32)
                @ params["w_ih"].astype(jnp.float32).T
                + params["b_ih"].astype(jnp.float32))                    # (vocab, 3H)
    V_pad = _round_up(vocab, 128)
    gi_table = jnp.pad(gi_table, ((0, V_pad - vocab), (0, 0)))

    # ---- batch tiling: >=2 blocks when B >= 16 so v7x's two TCs both get work ----
    if B > 128:
        b_blk = 128
    elif B >= 16:
        b_blk = _round_up((B + 1) // 2, 8)
    else:
        b_blk = _round_up(B, 8)
    B_pad = _round_up(B, b_blk)
    n_b = B_pad // b_blk

    # ---- time tiling: large blocks, capped so gi slab + one-hot stay a few MiB ----
    m_cap = max(1024, min(8192, (8 * 1024 * 1024) // (4 * V_pad)))
    t_cap = max(8, (m_cap // b_blk) // 8 * 8)
    t_blk = max(8, (min(t_block, _round_up(T, 8), t_cap) // 8) * 8)
    T_pad = _round_up(T, t_blk)
    n_t = T_pad // t_blk

    # ---- id layout glue: int32 only (4 B/token streamed), contiguous per grid block ----
    ids = jnp.pad(sym.astype(jnp.int32), ((0, B_pad - B), (0, T_pad - T)))
    ids = ids.T.reshape(T_pad, n_b, b_blk).transpose(1, 0, 2)            # (n_b, T_pad, b_blk)

    args = (
        ids, gi_table,
        params["w_hh"].astype(jnp.float32).T,
        params["b_hh"].astype(jnp.float32).reshape(1, -1),
        params["w1"].astype(jnp.float32).T, params["b1"].astype(jnp.float32).reshape(1, -1),
        params["w2"].astype(jnp.float32).T, params["b2"].astype(jnp.float32).reshape(1, -1),
        params["w3"].astype(jnp.float32).T, params["b3"].astype(jnp.float32).reshape(1, -1),
        params["w4"].astype(jnp.float32).reshape(1, -1),
        params["b4"].astype(jnp.float32).reshape(1, -1),
    )

    def _resident(a):  # full-array block, constant index map -> stays VMEM-resident
        return pl.BlockSpec(a.shape, lambda b, t: (0,) * a.ndim)

    in_specs = [pl.BlockSpec((None, t_blk, b_blk), lambda b, t: (b, t, 0))]
    in_specs += [_resident(a) for a in args[1:]]

    # VMEM budget: 3/4 of detected per-core VMEM, capped at 64 MiB (v7x has 64 MiB).
    try:
        vmem_cap = int(pltpu.get_tpu_info().vmem_capacity_bytes)
    except Exception:
        vmem_cap = 64 * 1024 * 1024
    vmem_limit = min(64 * 1024 * 1024, (vmem_cap * 3) // 4)

    kernel = _make_kernel(T, t_blk, b_blk, V_pad)

    out = pl.pallas_call(
        kernel,
        out_shape=jax.ShapeDtypeStruct((B_pad, 1), jnp.float32),
        grid_spec=pltpu.PrefetchScalarGridSpec(
            num_scalar_prefetch=0,
            grid=(n_b, n_t),
            in_specs=in_specs,
            out_specs=pl.BlockSpec((b_blk, 1), lambda b, t: (b, 0)),
            scratch_shapes=[
                pltpu.VMEM((b_blk, H), jnp.float32),
                pltpu.VMEM((t_blk * b_blk, 3 * H), jnp.float32),
            ],
        ),
        compiler_params=pltpu.CompilerParams(
            dimension_semantics=("parallel", "arbitrary"),
            vmem_limit_bytes=vmem_limit,
        ),
    )(*args)
    return out[:B]


def init_params(vocab_size, embed_size, key):
    assert embed_size == HIDDEN, "GRU input size is 64, so embed_size must be 64"
    keys = jax.random.split(key, 14)

    def unif(k, shape, fan_in):
        bound = 1.0 / jnp.sqrt(jnp.float32(fan_in))
        return jax.random.uniform(k, shape, jnp.float32, -bound, bound)

    params = {
        "embedding": jax.random.normal(keys[0], (vocab_size, embed_size), jnp.float32),
        # GRU parameters (PyTorch layout: (3H, in), gate order r|z|n)
        "w_ih": unif(keys[1], (3 * HIDDEN, HIDDEN), HIDDEN),
        "w_hh": unif(keys[2], (3 * HIDDEN, HIDDEN), HIDDEN),
        "b_ih": unif(keys[3], (3 * HIDDEN,), HIDDEN),
        "b_hh": unif(keys[4], (3 * HIDDEN,), HIDDEN),
        # MLP (PyTorch Linear layout: (out, in))
        "w1": unif(keys[5], (256, 64), 64),   "b1": unif(keys[6], (256,), 64),
        "w2": unif(keys[7], (128, 256), 256), "b2": unif(keys[8], (128,), 256),
        "w3": unif(keys[9], (64, 128), 128),  "b3": unif(keys[10], (64,), 128),
        "w4": unif(keys[11], (1, 64), 64),    "b4": unif(keys[12], (1,), 64),
    }
    return params


def reference(sym, params):
    """Pure-JAX reference matching PyTorch semantics, for sanity check."""
    x = jnp.take(params["embedding"], sym, axis=0)  # (B, T, 64)
    H = HIDDEN
    w_ih, w_hh = params["w_ih"], params["w_hh"]
    b_ih, b_hh = params["b_ih"], params["b_hh"]

    def step(h, x_t):
        gi = x_t @ w_ih.T + b_ih
        gh = h @ w_hh.T + b_hh
        r = jax.nn.sigmoid(gi[:, :H] + gh[:, :H])
        z = jax.nn.sigmoid(gi[:, H:2 * H] + gh[:, H:2 * H])
        n = jnp.tanh(gi[:, 2 * H:] + r * gh[:, 2 * H:])
        h_new = (1 - z) * n + z * h
        return h_new, None

    h0 = jnp.zeros((sym.shape[0], H), jnp.float32)
    h, _ = lax.scan(step, h0, jnp.transpose(x, (1, 0, 2)))

    y = h @ params["w1"].T + params["b1"]
    y = jnp.where(y > 0, y, LEAKY_SLOPE * y)
    y = y @ params["w2"].T + params["b2"]
    y = jnp.where(y > 0, y, LEAKY_SLOPE * y)
    y = y @ params["w3"].T + params["b3"]
    y = jnp.where(y > 0, y, LEAKY_SLOPE * y)
    y = jax.nn.sigmoid(y @ params["w4"].T + params["b4"])
    return y  # (B, 1)


if __name__ == "__main__":
    vocab_size, embed_size = 50, 64
    key = jax.random.PRNGKey(0)
    k_params, k_sym1, k_sym2, k_sym3 = jax.random.split(key, 4)
    params = init_params(vocab_size, embed_size, k_params)

    # Case 1: batch=2, seq=8 (GRU hidden/embed = 64); single batch/time block.
    B, T = 2, 8
    sym = jax.random.randint(k_sym1, (B, T), 0, vocab_size, dtype=jnp.int32)
    out = jax.block_until_ready(sym_discriminator(sym, params))
    ref = jax.block_until_ready(reference(sym, params))
    assert out.shape == (B, 1), out.shape
    assert jnp.allclose(out, ref, atol=1e-5, rtol=1e-5), (out, ref)

    # Case 2: ragged shapes exercise batch (3->8) and time (7->8) padding + masking.
    B2, T2 = 3, 7
    sym2 = jax.random.randint(k_sym2, (B2, T2), 0, vocab_size, dtype=jnp.int32)
    out2 = jax.block_until_ready(sym_discriminator(sym2, params))
    ref2 = jax.block_until_ready(reference(sym2, params))
    assert out2.shape == (B2, 1), out2.shape
    assert jnp.allclose(out2, ref2, atol=1e-5, rtol=1e-5), (out2, ref2)

    # Case 3: multiple batch blocks (n_b=2, megacore path) and time blocks (n_t=3).
    B3, T3 = 20, 20
    sym3 = jax.random.randint(k_sym3, (B3, T3), 0, vocab_size, dtype=jnp.int32)
    out3 = jax.block_until_ready(sym_discriminator(sym3, params, t_block=8))
    ref3 = jax.block_until_ready(reference(sym3, params))
    assert out3.shape == (B3, 1), out3.shape
    assert jnp.allclose(out3, ref3, atol=1e-4, rtol=1e-4), (out3, ref3)

    print("KERNEL_OK")
</pallas_src>

<mosaic_0001>
module attributes {stable_mosaic.version = 11 : i64} {
  func.func @kernel(%arg0: i32, %arg1: i32, %arg2: memref<1x8x8xi32, #tpu.memory_space<vmem>>, %arg3: memref<128x192xf32, #tpu.memory_space<vmem>>, %arg4: memref<64x192xf32, #tpu.memory_space<vmem>>, %arg5: memref<1x192xf32, #tpu.memory_space<vmem>>, %arg6: memref<64x256xf32, #tpu.memory_space<vmem>>, %arg7: memref<1x256xf32, #tpu.memory_space<vmem>>, %arg8: memref<256x128xf32, #tpu.memory_space<vmem>>, %arg9: memref<1x128xf32, #tpu.memory_space<vmem>>, %arg10: memref<128x64xf32, #tpu.memory_space<vmem>>, %arg11: memref<1x64xf32, #tpu.memory_space<vmem>>, %arg12: memref<1x64xf32, #tpu.memory_space<vmem>>, %arg13: memref<1x1xf32, #tpu.memory_space<vmem>>, %arg14: memref<8x1xf32, #tpu.memory_space<vmem>>, %arg15: memref<8x64xf32, #tpu.memory_space<vmem>>, %arg16: memref<64x192xf32, #tpu.memory_space<vmem>>) attributes {dimension_semantics = [#tpu.dimension_semantics<parallel>, #tpu.dimension_semantics<arbitrary>], iteration_bounds = array<i64: 1, 1>, scalar_prefetch = 0 : i64, scratch_operands = 2 : i64, tpu.core_type = #tpu.core_type<tc>, window_params = [{transform_indices = @transform_0, window_bounds = array<i64: 1, 8, 8>}, {pipeline_mode = #tpu.pipeline_mode<synchronous>, transform_indices = @transform_1, window_bounds = array<i64: 128, 192>}, {pipeline_mode = #tpu.pipeline_mode<synchronous>, transform_indices = @transform_2, window_bounds = array<i64: 64, 192>}, {pipeline_mode = #tpu.pipeline_mode<synchronous>, transform_indices = @transform_3, window_bounds = array<i64: 1, 192>}, {pipeline_mode = #tpu.pipeline_mode<synchronous>, transform_indices = @transform_4, window_bounds = array<i64: 64, 256>}, {pipeline_mode = #tpu.pipeline_mode<synchronous>, transform_indices = @transform_5, window_bounds = array<i64: 1, 256>}, {pipeline_mode = #tpu.pipeline_mode<synchronous>, transform_indices = @transform_6, window_bounds = array<i64: 256, 128>}, {pipeline_mode = #tpu.pipeline_mode<synchronous>, transform_indices = @transform_7, window_bounds = array<i64: 1, 128>}, {pipeline_mode = #tpu.pipeline_mode<synchronous>, transform_indices = @transform_8, window_bounds = array<i64: 128, 64>}, {pipeline_mode = #tpu.pipeline_mode<synchronous>, transform_indices = @transform_9, window_bounds = array<i64: 1, 64>}, {pipeline_mode = #tpu.pipeline_mode<synchronous>, transform_indices = @transform_10, window_bounds = array<i64: 1, 64>}, {pipeline_mode = #tpu.pipeline_mode<synchronous>, transform_indices = @transform_11, window_bounds = array<i64: 1, 1>}, {transform_indices = @transform_12, window_bounds = array<i64: 8, 1>}]} {
    %c0_i32 = arith.constant 0 : i32
    %0 = arith.cmpi eq, %arg1, %c0_i32 : i32
    %1 = arith.extui %0 : i1 to i32
    %c0_i32_0 = arith.constant 0 : i32
    %2 = arith.cmpi ne, %1, %c0_i32_0 : i32
    scf.if %2 {
      %cst_58 = arith.constant 0.000000e+00 : f32
      %232 = vector.broadcast %cst_58 : f32 to vector<8x64xf32>
      %c0_59 = arith.constant 0 : index
      %c0_60 = arith.constant 0 : index
      %233 = vector.load %arg15[%c0_59, %c0_60] : memref<8x64xf32, #tpu.memory_space<vmem>>, vector<8x64xf32>
      tpu.vector_store %arg15[%c0_59, %c0_60], %232 {strides = array<i32>} : memref<8x64xf32, #tpu.memory_space<vmem>>, vector<8x64xf32>,
    } else {
    }
    %c0 = arith.constant 0 : index
    %c0_1 = arith.constant 0 : index
    %c0_2 = arith.constant 0 : index
    %3 = vector.load %arg2[%c0, %c0_1, %c0_2] : memref<1x8x8xi32, #tpu.memory_space<vmem>>, vector<1x8x8xi32>
    %4 = vector.shape_cast %3 : vector<1x8x8xi32> to vector<8x8xi32>
    %5 = tpu.iota {dimensions = array<i32: 2>} : vector<8x8x128xi32>
    %6 = vector.shape_cast %4 : vector<8x8xi32> to vector<8x8x1xi32>
    %7 = vector.broadcast %6 : vector<8x8x1xi32> to vector<8x8x128xi32>
    %8 = arith.cmpi eq, %7, %5 : vector<8x8x128xi32>
    %9 = arith.extui %8 : vector<8x8x128xi1> to vector<8x8x128xi32>
    %10 = arith.sitofp %9 : vector<8x8x128xi32> to vector<8x8x128xf32>
    %11 = vector.shape_cast %10 : vector<8x8x128xf32> to vector<64x128xf32>
    %c0_3 = arith.constant 0 : index
    %c0_4 = arith.constant 0 : index
    %12 = vector.load %arg3[%c0_3, %c0_4] : memref<128x192xf32, #tpu.memory_space<vmem>>, vector<128x192xf32>
    %cst = arith.constant dense<0.000000e+00> : vector<64x192xf32>
    %13 = tpu.matmul %11, %12, %cst {dimension_numbers = #tpu.dot_dimension_numbers<[1], [0], [0], [1], [0, 0, 1, 1], [], []>} : vector<64x128xf32>, vector<128x192xf32>, vector<64x192xf32> -> vector<64x192xf32>
    %c0_5 = arith.constant 0 : index
    %c0_6 = arith.constant 0 : index
    %14 = vector.load %arg16[%c0_5, %c0_6] : memref<64x192xf32, #tpu.memory_space<vmem>>, vector<64x192xf32>
    tpu.vector_store %arg16[%c0_5, %c0_6], %13 {strides = array<i32>} : memref<64x192xf32, #tpu.memory_space<vmem>>, vector<64x192xf32>,
    %c0_7 = arith.constant 0 : index
    %c0_8 = arith.constant 0 : index
    %15 = vector.load %arg4[%c0_7, %c0_8] : memref<64x192xf32, #tpu.memory_space<vmem>>, vector<64x192xf32>
    %c0_9 = arith.constant 0 : index
    %c0_10 = arith.constant 0 : index
    %16 = vector.load %arg5[%c0_9, %c0_10] : memref<1x192xf32, #tpu.memory_space<vmem>>, vector<1x192xf32>
    %17 = vector.shape_cast %16 : vector<1x192xf32> to vector<1x192xf32>
    %18 = vector.broadcast %17 : vector<1x192xf32> to vector<8x192xf32>
    %c0_11 = arith.constant 0 : index
    %c0_12 = arith.constant 0 : index
    %19 = vector.load %arg15[%c0_11, %c0_12] : memref<8x64xf32, #tpu.memory_space<vmem>>, vector<8x64xf32>
    %c0_i32_13 = arith.constant 0 : i32
    %c8_i32 = arith.constant 8 : i32
    %20 = arith.muli %c0_i32_13, %c8_i32 : i32
    %21 = tpu.assume_multiple %20, 8 : i32
    %22 = arith.index_cast %21 : i32 to index
    %c0_14 = arith.constant 0 : index
    %23 = vector.load %arg16[%22, %c0_14] : memref<64x192xf32, #tpu.memory_space<vmem>>, vector<8x192xf32>
    %cst_15 = arith.constant dense<0.000000e+00> : vector<8x192xf32>
    %24 = tpu.matmul %19, %15, %cst_15 {dimension_numbers = #tpu.dot_dimension_numbers<[1], [0], [0], [1], [0, 0, 1, 1], [], []>} : vector<8x64xf32>, vector<64x192xf32>, vector<8x192xf32> -> vector<8x192xf32>
    %25 = arith.addf %24, %18 : vector<8x192xf32>
    %26 = vector.extract_strided_slice %23 {offsets = [0, 0], sizes = [8, 128], strides = [1, 1]} : vector<8x192xf32> to vector<8x128xf32>
    %27 = vector.extract_strided_slice %25 {offsets = [0, 0], sizes = [8, 128], strides = [1, 1]} : vector<8x192xf32> to vector<8x128xf32>
    %28 = arith.addf %26, %27 : vector<8x128xf32>
    %29 = arith.negf %28 : vector<8x128xf32>
    %30 = math.exp %29 : vector<8x128xf32>
    %cst_16 = arith.constant 1.000000e+00 : f32
    %31 = vector.broadcast %cst_16 : f32 to vector<8x128xf32>
    %32 = arith.addf %31, %30 : vector<8x128xf32>
    %33 = arith.divf %31, %32 : vector<8x128xf32>
    %34 = vector.extract_strided_slice %33 {offsets = [0, 0], sizes = [8, 64], strides = [1, 1]} : vector<8x128xf32> to vector<8x64xf32>
    %35 = vector.extract_strided_slice %33 {offsets = [0, 64], sizes = [8, 64], strides = [1, 1]} : vector<8x128xf32> to vector<8x64xf32>
    %36 = vector.extract_strided_slice %23 {offsets = [0, 128], sizes = [8, 64], strides = [1, 1]} : vector<8x192xf32> to vector<8x64xf32>
    %37 = vector.extract_strided_slice %25 {offsets = [0, 128], sizes = [8, 64], strides = [1, 1]} : vector<8x192xf32> to vector<8x64xf32>
    %38 = arith.mulf %34, %37 : vector<8x64xf32>
    %39 = arith.addf %36, %38 : vector<8x64xf32>
    %40 = math.tanh %39 : vector<8x64xf32>
    %cst_17 = arith.constant 1.000000e+00 : f32
    %41 = vector.broadcast %cst_17 : f32 to vector<8x64xf32>
    %42 = arith.subf %41, %35 : vector<8x64xf32>
    %43 = arith.mulf %42, %40 : vector<8x64xf32>
    %44 = arith.mulf %35, %19 : vector<8x64xf32>
    %45 = arith.addf %43, %44 : vector<8x64xf32>
    %c1_i32 = arith.constant 1 : i32
    %c8_i32_18 = arith.constant 8 : i32
    %46 = arith.muli %c1_i32, %c8_i32_18 : i32
    %47 = tpu.assume_multiple %46, 8 : i32
    %48 = arith.index_cast %47 : i32 to index
    %c0_19 = arith.constant 0 : index
    %49 = vector.load %arg16[%48, %c0_19] : memref<64x192xf32, #tpu.memory_space<vmem>>, vector<8x192xf32>
    %cst_20 = arith.constant dense<0.000000e+00> : vector<8x192xf32>
    %50 = tpu.matmul %45, %15, %cst_20 {dimension_numbers = #tpu.dot_dimension_numbers<[1], [0], [0], [1], [0, 0, 1, 1], [], []>} : vector<8x64xf32>, vector<64x192xf32>, vector<8x192xf32> -> vector<8x192xf32>
    %51 = arith.addf %50, %18 : vector<8x192xf32>
    %52 = vector.extract_strided_slice %49 {offsets = [0, 0], sizes = [8, 128], strides = [1, 1]} : vector<8x192xf32> to vector<8x128xf32>
    %53 = vector.extract_strided_slice %51 {offsets = [0, 0], sizes = [8, 128], strides = [1, 1]} : vector<8x192xf32> to vector<8x128xf32>
    %54 = arith.addf %52, %53 : vector<8x128xf32>
    %55 = arith.negf %54 : vector<8x128xf32>
    %56 = math.exp %55 : vector<8x128xf32>
    %cst_21 = arith.constant 1.000000e+00 : f32
    %57 = vector.broadcast %cst_21 : f32 to vector<8x128xf32>
    %58 = arith.addf %57, %56 : vector<8x128xf32>
    %59 = arith.divf %57, %58 : vector<8x128xf32>
    %60 = vector.extract_strided_slice %59 {offsets = [0, 0], sizes = [8, 64], strides = [1, 1]} : vector<8x128xf32> to vector<8x64xf32>
    %61 = vector.extract_strided_slice %59 {offsets = [0, 64], sizes = [8, 64], strides = [1, 1]} : vector<8x128xf32> to vector<8x64xf32>
    %62 = vector.extract_strided_slice %49 {offsets = [0, 128], sizes = [8, 64], strides = [1, 1]} : vector<8x192xf32> to vector<8x64xf32>
    %63 = vector.extract_strided_slice %51 {offsets = [0, 128], sizes = [8, 64], strides = [1, 1]} : vector<8x192xf32> to vector<8x64xf32>
    %64 = arith.mulf %60, %63 : vector<8x64xf32>
    %65 = arith.addf %62, %64 : vector<8x64xf32>
    %66 = math.tanh %65 : vector<8x64xf32>
    %cst_22 = arith.constant 1.000000e+00 : f32
    %67 = vector.broadcast %cst_22 : f32 to vector<8x64xf32>
    %68 = arith.subf %67, %61 : vector<8x64xf32>
    %69 = arith.mulf %68, %66 : vector<8x64xf32>
    %70 = arith.mulf %61, %45 : vector<8x64xf32>
    %71 = arith.addf %69, %70 : vector<8x64xf32>
    %c2_i32 = arith.constant 2 : i32
    %c8_i32_23 = arith.constant 8 : i32
    %72 = arith.muli %c2_i32, %c8_i32_23 : i32
    %73 = tpu.assume_multiple %72, 8 : i32
    %74 = arith.index_cast %73 : i32 to index
    %c0_24 = arith.constant 0 : index
    %75 = vector.load %arg16[%74, %c0_24] : memref<64x192xf32, #tpu.memory_space<vmem>>, vector<8x192xf32>
    %cst_25 = arith.constant dense<0.000000e+00> : vector<8x192xf32>
    %76 = tpu.matmul %71, %15, %cst_25 {dimension_numbers = #tpu.dot_dimension_numbers<[1], [0], [0], [1], [0, 0, 1, 1], [], []>} : vector<8x64xf32>, vector<64x192xf32>, vector<8x192xf32> -> vector<8x192xf32>
    %77 = arith.addf %76, %18 : vector<8x192xf32>
    %78 = vector.extract_strided_slice %75 {offsets = [0, 0], sizes = [8, 128], strides = [1, 1]} : vector<8x192xf32> to vector<8x128xf32>
    %79 = vector.extract_strided_slice %77 {offsets = [0, 0], sizes = [8, 128], strides = [1, 1]} : vector<8x192xf32> to vector<8x128xf32>
    %80 = arith.addf %78, %79 : vector<8x128xf32>
    %81 = arith.negf %80 : vector<8x128xf32>
    %82 = math.exp %81 : vector<8x128xf32>
    %cst_26 = arith.constant 1.000000e+00 : f32
    %83 = vector.broadcast %cst_26 : f32 to vector<8x128xf32>
    %84 = arith.addf %83, %82 : vector<8x128xf32>
    %85 = arith.divf %83, %84 : vector<8x128xf32>
    %86 = vector.extract_strided_slice %85 {offsets = [0, 0], sizes = [8, 64], strides = [1, 1]} : vector<8x128xf32> to vector<8x64xf32>
    %87 = vector.extract_strided_slice %85 {offsets = [0, 64], sizes = [8, 64], strides = [1, 1]} : vector<8x128xf32> to vector<8x64xf32>
    %88 = vector.extract_strided_slice %75 {offsets = [0, 128], sizes = [8, 64], strides = [1, 1]} : vector<8x192xf32> to vector<8x64xf32>
    %89 = vector.extract_strided_slice %77 {offsets = [0, 128], sizes = [8, 64], strides = [1, 1]} : vector<8x192xf32> to vector<8x64xf32>
    %90 = arith.mulf %86, %89 : vector<8x64xf32>
    %91 = arith.addf %88, %90 : vector<8x64xf32>
    %92 = math.tanh %91 : vector<8x64xf32>
    %cst_27 = arith.constant 1.000000e+00 : f32
    %93 = vector.broadcast %cst_27 : f32 to vector<8x64xf32>
    %94 = arith.subf %93, %87 : vector<8x64xf32>
    %95 = arith.mulf %94, %92 : vector<8x64xf32>
    %96 = arith.mulf %87, %71 : vector<8x64xf32>
    %97 = arith.addf %95, %96 : vector<8x64xf32>
    %c3_i32 = arith.constant 3 : i32
    %c8_i32_28 = arith.constant 8 : i32
    %98 = arith.muli %c3_i32, %c8_i32_28 : i32
    %99 = tpu.assume_multiple %98, 8 : i32
    %100 = arith.index_cast %99 : i32 to index
    %c0_29 = arith.constant 0 : index
    %101 = vector.load %arg16[%100, %c0_29] : memref<64x192xf32, #tpu.memory_space<vmem>>, vector<8x192xf32>
    %cst_30 = arith.constant dense<0.000000e+00> : vector<8x192xf32>
    %102 = tpu.matmul %97, %15, %cst_30 {dimension_numbers = #tpu.dot_dimension_numbers<[1], [0], [0], [1], [0, 0, 1, 1], [], []>} : vector<8x64xf32>, vector<64x192xf32>, vector<8x192xf32> -> vector<8x192xf32>
    %103 = arith.addf %102, %18 : vector<8x192xf32>
    %104 = vector.extract_strided_slice %101 {offsets = [0, 0], sizes = [8, 128], strides = [1, 1]} : vector<8x192xf32> to vector<8x128xf32>
    %105 = vector.extract_strided_slice %103 {offsets = [0, 0], sizes = [8, 128], strides = [1, 1]} : vector<8x192xf32> to vector<8x128xf32>
    %106 = arith.addf %104, %105 : vector<8x128xf32>
    %107 = arith.negf %106 : vector<8x128xf32>
    %108 = math.exp %107 : vector<8x128xf32>
    %cst_31 = arith.constant 1.000000e+00 : f32
    %109 = vector.broadcast %cst_31 : f32 to vector<8x128xf32>
    %110 = arith.addf %109, %108 : vector<8x128xf32>
    %111 = arith.divf %109, %110 : vector<8x128xf32>
    %112 = vector.extract_strided_slice %111 {offsets = [0, 0], sizes = [8, 64], strides = [1, 1]} : vector<8x128xf32> to vector<8x64xf32>
    %113 = vector.extract_strided_slice %111 {offsets = [0, 64], sizes = [8, 64], strides = [1, 1]} : vector<8x128xf32> to vector<8x64xf32>
    %114 = vector.extract_strided_slice %101 {offsets = [0, 128], sizes = [8, 64], strides = [1, 1]} : vector<8x192xf32> to vector<8x64xf32>
    %115 = vector.extract_strided_slice %103 {offsets = [0, 128], sizes = [8, 64], strides = [1, 1]} : vector<8x192xf32> to vector<8x64xf32>
    %116 = arith.mulf %112, %115 : vector<8x64xf32>
    %117 = arith.addf %114, %116 : vector<8x64xf32>
    %118 = math.tanh %117 : vector<8x64xf32>
    %cst_32 = arith.constant 1.000000e+00 : f32
    %119 = vector.broadcast %cst_32 : f32 to vector<8x64xf32>
    %120 = arith.subf %119, %113 : vector<8x64xf32>
    %121 = arith.mulf %120, %118 : vector<8x64xf32>
    %122 = arith.mulf %113, %97 : vector<8x64xf32>
    %123 = arith.addf %121, %122 : vector<8x64xf32>
    %c4_i32 = arith.constant 4 : i32
    %c8_i32_33 = arith.constant 8 : i32
    %124 = arith.muli %c4_i32, %c8_i32_33 : i32
    %125 = tpu.assume_multiple %124, 8 : i32
    %126 = arith.index_cast %125 : i32 to index
    %c0_34 = arith.constant 0 : index
    %127 = vector.load %arg16[%126, %c0_34] : memref<64x192xf32, #tpu.memory_space<vmem>>, vector<8x192xf32>
    %cst_35 = arith.constant dense<0.000000e+00> : vector<8x192xf32>
    %128 = tpu.matmul %123, %15, %cst_35 {dimension_numbers = #tpu.dot_dimension_numbers<[1], [0], [0], [1], [0, 0, 1, 1], [], []>} : vector<8x64xf32>, vector<64x192xf32>, vector<8x192xf32> -> vector<8x192xf32>
    %129 = arith.addf %128, %18 : vector<8x192xf32>
    %130 = vector.extract_strided_slice %127 {offsets = [0, 0], sizes = [8, 128], strides = [1, 1]} : vector<8x192xf32> to vector<8x128xf32>
    %131 = vector.extract_strided_slice %129 {offsets = [0, 0], sizes = [8, 128], strides = [1, 1]} : vector<8x192xf32> to vector<8x128xf32>
    %132 = arith.addf %130, %131 : vector<8x128xf32>
    %133 = arith.negf %132 : vector<8x128xf32>
    %134 = math.exp %133 : vector<8x128xf32>
    %cst_36 = arith.constant 1.000000e+00 : f32
    %135 = vector.broadcast %cst_36 : f32 to vector<8x128xf32>
    %136 = arith.addf %135, %134 : vector<8x128xf32>
    %137 = arith.divf %135, %136 : vector<8x128xf32>
    %138 = vector.extract_strided_slice %137 {offsets = [0, 0], sizes = [8, 64], strides = [1, 1]} : vector<8x128xf32> to vector<8x64xf32>
    %139 = vector.extract_strided_slice %137 {offsets = [0, 64], sizes = [8, 64], strides = [1, 1]} : vector<8x128xf32> to vector<8x64xf32>
    %140 = vector.extract_strided_slice %127 {offsets = [0, 128], sizes = [8, 64], strides = [1, 1]} : vector<8x192xf32> to vector<8x64xf32>
    %141 = vector.extract_strided_slice %129 {offsets = [0, 128], sizes = [8, 64], strides = [1, 1]} : vector<8x192xf32> to vector<8x64xf32>
    %142 = arith.mulf %138, %141 : vector<8x64xf32>
    %143 = arith.addf %140, %142 : vector<8x64xf32>
    %144 = math.tanh %143 : vector<8x64xf32>
    %cst_37 = arith.constant 1.000000e+00 : f32
    %145 = vector.broadcast %cst_37 : f32 to vector<8x64xf32>
    %146 = arith.subf %145, %139 : vector<8x64xf32>
    %147 = arith.mulf %146, %144 : vector<8x64xf32>
    %148 = arith.mulf %139, %123 : vector<8x64xf32>
    %149 = arith.addf %147, %148 : vector<8x64xf32>
    %c5_i32 = arith.constant 5 : i32
    %c8_i32_38 = arith.constant 8 : i32
    %150 = arith.muli %c5_i32, %c8_i32_38 : i32
    %151 = tpu.assume_multiple %150, 8 : i32
    %152 = arith.index_cast %151 : i32 to index
    %c0_39 = arith.constant 0 : index
    %153 = vector.load %arg16[%152, %c0_39] : memref<64x192xf32, #tpu.memory_space<vmem>>, vector<8x192xf32>
    %cst_40 = arith.constant dense<0.000000e+00> : vector<8x192xf32>
    %154 = tpu.matmul %149, %15, %cst_40 {dimension_numbers = #tpu.dot_dimension_numbers<[1], [0], [0], [1], [0, 0, 1, 1], [], []>} : vector<8x64xf32>, vector<64x192xf32>, vector<8x192xf32> -> vector<8x192xf32>
    %155 = arith.addf %154, %18 : vector<8x192xf32>
    %156 = vector.extract_strided_slice %153 {offsets = [0, 0], sizes = [8, 128], strides = [1, 1]} : vector<8x192xf32> to vector<8x128xf32>
    %157 = vector.extract_strided_slice %155 {offsets = [0, 0], sizes = [8, 128], strides = [1, 1]} : vector<8x192xf32> to vector<8x128xf32>
    %158 = arith.addf %156, %157 : vector<8x128xf32>
    %159 = arith.negf %158 : vector<8x128xf32>
    %160 = math.exp %159 : vector<8x128xf32>
    %cst_41 = arith.constant 1.000000e+00 : f32
    %161 = vector.broadcast %cst_41 : f32 to vector<8x128xf32>
    %162 = arith.addf %161, %160 : vector<8x128xf32>
    %163 = arith.divf %161, %162 : vector<8x128xf32>
    %164 = vector.extract_strided_slice %163 {offsets = [0, 0], sizes = [8, 64], strides = [1, 1]} : vector<8x128xf32> to vector<8x64xf32>
    %165 = vector.extract_strided_slice %163 {offsets = [0, 64], sizes = [8, 64], strides = [1, 1]} : vector<8x128xf32> to vector<8x64xf32>
    %166 = vector.extract_strided_slice %153 {offsets = [0, 128], sizes = [8, 64], strides = [1, 1]} : vector<8x192xf32> to vector<8x64xf32>
    %167 = vector.extract_strided_slice %155 {offsets = [0, 128], sizes = [8, 64], strides = [1, 1]} : vector<8x192xf32> to vector<8x64xf32>
    %168 = arith.mulf %164, %167 : vector<8x64xf32>
    %169 = arith.addf %166, %168 : vector<8x64xf32>
    %170 = math.tanh %169 : vector<8x64xf32>
    %cst_42 = arith.constant 1.000000e+00 : f32
    %171 = vector.broadcast %cst_42 : f32 to vector<8x64xf32>
    %172 = arith.subf %171, %165 : vector<8x64xf32>
    %173 = arith.mulf %172, %170 : vector<8x64xf32>
    %174 = arith.mulf %165, %149 : vector<8x64xf32>
    %175 = arith.addf %173, %174 : vector<8x64xf32>
    %c6_i32 = arith.constant 6 : i32
    %c8_i32_43 = arith.constant 8 : i32
    %176 = arith.muli %c6_i32, %c8_i32_43 : i32
    %177 = tpu.assume_multiple %176, 8 : i32
    %178 = arith.index_cast %177 : i32 to index
    %c0_44 = arith.constant 0 : index
    %179 = vector.load %arg16[%178, %c0_44] : memref<64x192xf32, #tpu.memory_space<vmem>>, vector<8x192xf32>
    %cst_45 = arith.constant dense<0.000000e+00> : vector<8x192xf32>
    %180 = tpu.matmul %175, %15, %cst_45 {dimension_numbers = #tpu.dot_dimension_numbers<[1], [0], [0], [1], [0, 0, 1, 1], [], []>} : vector<8x64xf32>, vector<64x192xf32>, vector<8x192xf32> -> vector<8x192xf32>
    %181 = arith.addf %180, %18 : vector<8x192xf32>
    %182 = vector.extract_strided_slice %179 {offsets = [0, 0], sizes = [8, 128], strides = [1, 1]} : vector<8x192xf32> to vector<8x128xf32>
    %183 = vector.extract_strided_slice %181 {offsets = [0, 0], sizes = [8, 128], strides = [1, 1]} : vector<8x192xf32> to vector<8x128xf32>
    %184 = arith.addf %182, %183 : vector<8x128xf32>
    %185 = arith.negf %184 : vector<8x128xf32>
    %186 = math.exp %185 : vector<8x128xf32>
    %cst_46 = arith.constant 1.000000e+00 : f32
    %187 = vector.broadcast %cst_46 : f32 to vector<8x128xf32>
    %188 = arith.addf %187, %186 : vector<8x128xf32>
    %189 = arith.divf %187, %188 : vector<8x128xf32>
    %190 = vector.extract_strided_slice %189 {offsets = [0, 0], sizes = [8, 64], strides = [1, 1]} : vector<8x128xf32> to vector<8x64xf32>
    %191 = vector.extract_strided_slice %189 {offsets = [0, 64], sizes = [8, 64], strides = [1, 1]} : vector<8x128xf32> to vector<8x64xf32>
    %192 = vector.extract_strided_slice %179 {offsets = [0, 128], sizes = [8, 64], strides = [1, 1]} : vector<8x192xf32> to vector<8x64xf32>
    %193 = vector.extract_strided_slice %181 {offsets = [0, 128], sizes = [8, 64], strides = [1, 1]} : vector<8x192xf32> to vector<8x64xf32>
    %194 = arith.mulf %190, %193 : vector<8x64xf32>
    %195 = arith.addf %192, %194 : vector<8x64xf32>
    %196 = math.tanh %195 : vector<8x64xf32>
    %cst_47 = arith.constant 1.000000e+00 : f32
    %197 = vector.broadcast %cst_47 : f32 to vector<8x64xf32>
    %198 = arith.subf %197, %191 : vector<8x64xf32>
    %199 = arith.mulf %198, %196 : vector<8x64xf32>
    %200 = arith.mulf %191, %175 : vector<8x64xf32>
    %201 = arith.addf %199, %200 : vector<8x64xf32>
    %c7_i32 = arith.constant 7 : i32
    %c8_i32_48 = arith.constant 8 : i32
    %202 = arith.muli %c7_i32, %c8_i32_48 : i32
    %203 = tpu.assume_multiple %202, 8 : i32
    %204 = arith.index_cast %203 : i32 to index
    %c0_49 = arith.constant 0 : index
    %205 = vector.load %arg16[%204, %c0_49] : memref<64x192xf32, #tpu.memory_space<vmem>>, vector<8x192xf32>
    %cst_50 = arith.constant dense<0.000000e+00> : vector<8x192xf32>
    %206 = tpu.matmul %201, %15, %cst_50 {dimension_numbers = #tpu.dot_dimension_numbers<[1], [0], [0], [1], [0, 0, 1, 1], [], []>} : vector<8x64xf32>, vector<64x192xf32>, vector<8x192xf32> -> vector<8x192xf32>
    %207 = arith.addf %206, %18 : vector<8x192xf32>
    %208 = vector.extract_strided_slice %205 {offsets = [0, 0], sizes = [8, 128], strides = [1, 1]} : vector<8x192xf32> to vector<8x128xf32>
    %209 = vector.extract_strided_slice %207 {offsets = [0, 0], sizes = [8, 128], strides = [1, 1]} : vector<8x192xf32> to vector<8x128xf32>
    %210 = arith.addf %208, %209 : vector<8x128xf32>
    %211 = arith.negf %210 : vector<8x128xf32>
    %212 = math.exp %211 : vector<8x128xf32>
    %cst_51 = arith.constant 1.000000e+00 : f32
    %213 = vector.broadcast %cst_51 : f32 to vector<8x128xf32>
    %214 = arith.addf %213, %212 : vector<8x128xf32>
    %215 = arith.divf %213, %214 : vector<8x128xf32>
    %216 = vector.extract_strided_slice %215 {offsets = [0, 0], sizes = [8, 64], strides = [1, 1]} : vector<8x128xf32> to vector<8x64xf32>
    %217 = vector.extract_strided_slice %215 {offsets = [0, 64], sizes = [8, 64], strides = [1, 1]} : vector<8x128xf32> to vector<8x64xf32>
    %218 = vector.extract_strided_slice %205 {offsets = [0, 128], sizes = [8, 64], strides = [1, 1]} : vector<8x192xf32> to vector<8x64xf32>
    %219 = vector.extract_strided_slice %207 {offsets = [0, 128], sizes = [8, 64], strides = [1, 1]} : vector<8x192xf32> to vector<8x64xf32>
    %220 = arith.mulf %216, %219 : vector<8x64xf32>
    %221 = arith.addf %218, %220 : vector<8x64xf32>
    %222 = math.tanh %221 : vector<8x64xf32>
    %cst_52 = arith.constant 1.000000e+00 : f32
    %223 = vector.broadcast %cst_52 : f32 to vector<8x64xf32>
    %224 = arith.subf %223, %217 : vector<8x64xf32>
    %225 = arith.mulf %224, %222 : vector<8x64xf32>
    %226 = arith.mulf %217, %201 : vector<8x64xf32>
    %227 = arith.addf %225, %226 : vector<8x64xf32>
    %c8_i32_53 = arith.constant 8 : i32
    %c0_54 = arith.constant 0 : index
    %c0_55 = arith.constant 0 : index
    %228 = vector.load %arg15[%c0_54, %c0_55] : memref<8x64xf32, #tpu.memory_space<vmem>>, vector<8x64xf32>
    tpu.vector_store %arg15[%c0_54, %c0_55], %227 {strides = array<i32>} : memref<8x64xf32, #tpu.memory_space<vmem>>, vector<8x64xf32>,
    %c0_i32_56 = arith.constant 0 : i32
    %229 = arith.cmpi eq, %arg1, %c0_i32_56 : i32
    %230 = arith.extui %229 : i1 to i32
    %c0_i32_57 = arith.constant 0 : i32
    %231 = arith.cmpi ne, %230, %c0_i32_57 : i32
    scf.if %231 {
      %c0_58 = arith.constant 0 : index
      %c0_59 = arith.constant 0 : index
      %232 = vector.load %arg6[%c0_58, %c0_59] : memref<64x256xf32, #tpu.memory_space<vmem>>, vector<64x256xf32>
      %cst_60 = arith.constant dense<0.000000e+00> : vector<8x256xf32>
      %233 = tpu.matmul %227, %232, %cst_60 {dimension_numbers = #tpu.dot_dimension_numbers<[1], [0], [0], [1], [0, 0, 1, 1], [], []>} : vector<8x64xf32>, vector<64x256xf32>, vector<8x256xf32> -> vector<8x256xf32>
      %c0_61 = arith.constant 0 : index
      %c0_62 = arith.constant 0 : index
      %234 = vector.load %arg7[%c0_61, %c0_62] : memref<1x256xf32, #tpu.memory_space<vmem>>, vector<1x256xf32>
      %235 = vector.broadcast %234 : vector<1x256xf32> to vector<8x256xf32>
      %236 = arith.addf %233, %235 : vector<8x256xf32>
      %cst_63 = arith.constant 0.000000e+00 : f32
      %237 = vector.broadcast %cst_63 : f32 to vector<8x256xf32>
      %238 = arith.cmpf ogt, %236, %237 : vector<8x256xf32>
      %cst_64 = arith.constant 0.00999999977 : f32
      %239 = vector.broadcast %cst_64 : f32 to vector<8x256xf32>
      %240 = arith.mulf %239, %236 : vector<8x256xf32>
      %241 = arith.select %238, %236, %240 : vector<8x256xi1>, vector<8x256xf32>
      %c0_65 = arith.constant 0 : index
      %c0_66 = arith.constant 0 : index
      %242 = vector.load %arg8[%c0_65, %c0_66] : memref<256x128xf32, #tpu.memory_space<vmem>>, vector<256x128xf32>
      %cst_67 = arith.constant dense<0.000000e+00> : vector<8x128xf32>
      %243 = tpu.matmul %241, %242, %cst_67 {dimension_numbers = #tpu.dot_dimension_numbers<[1], [0], [0], [1], [0, 0, 1, 1], [], []>} : vector<8x256xf32>, vector<256x128xf32>, vector<8x128xf32> -> vector<8x128xf32>
      %c0_68 = arith.constant 0 : index
      %c0_69 = arith.constant 0 : index
      %244 = vector.load %arg9[%c0_68, %c0_69] : memref<1x128xf32, #tpu.memory_space<vmem>>, vector<1x128xf32>
      %245 = vector.broadcast %244 : vector<1x128xf32> to vector<8x128xf32>
      %246 = arith.addf %243, %245 : vector<8x128xf32>
      %cst_70 = arith.constant 0.000000e+00 : f32
      %247 = vector.broadcast %cst_70 : f32 to vector<8x128xf32>
      %248 = arith.cmpf ogt, %246, %247 : vector<8x128xf32>
      %cst_71 = arith.constant 0.00999999977 : f32
      %249 = vector.broadcast %cst_71 : f32 to vector<8x128xf32>
      %250 = arith.mulf %249, %246 : vector<8x128xf32>
      %251 = arith.select %248, %246, %250 : vector<8x128xi1>, vector<8x128xf32>
      %c0_72 = arith.constant 0 : index
      %c0_73 = arith.constant 0 : index
      %252 = vector.load %arg10[%c0_72, %c0_73] : memref<128x64xf32, #tpu.memory_space<vmem>>, vector<128x64xf32>
      %cst_74 = arith.constant dense<0.000000e+00> : vector<8x64xf32>
      %253 = tpu.matmul %251, %252, %cst_74 {dimension_numbers = #tpu.dot_dimension_numbers<[1], [0], [0], [1], [0, 0, 1, 1], [], []>} : vector<8x128xf32>, vector<128x64xf32>, vector<8x64xf32> -> vector<8x64xf32>
      %c0_75 = arith.constant 0 : index
      %c0_76 = arith.constant 0 : index
      %254 = vector.load %arg11[%c0_75, %c0_76] : memref<1x64xf32, #tpu.memory_space<vmem>>, vector<1x64xf32>
      %255 = vector.broadcast %254 : vector<1x64xf32> to vector<8x64xf32>
      %256 = arith.addf %253, %255 : vector<8x64xf32>
      %cst_77 = arith.constant 0.000000e+00 : f32
      %257 = vector.broadcast %cst_77 : f32 to vector<8x64xf32>
      %258 = arith.cmpf ogt, %256, %257 : vector<8x64xf32>
      %cst_78 = arith.constant 0.00999999977 : f32
      %259 = vector.broadcast %cst_78 : f32 to vector<8x64xf32>
      %260 = arith.mulf %259, %256 : vector<8x64xf32>
      %261 = arith.select %258, %256, %260 : vector<8x64xi1>, vector<8x64xf32>
      %c0_79 = arith.constant 0 : index
      %c0_80 = arith.constant 0 : index
      %262 = vector.load %arg12[%c0_79, %c0_80] : memref<1x64xf32, #tpu.memory_space<vmem>>, vector<1x64xf32>
      %263 = vector.broadcast %262 : vector<1x64xf32> to vector<8x64xf32>
      %264 = arith.mulf %261, %263 : vector<8x64xf32>
      %cst_81 = arith.constant dense<0.000000e+00> : vector<8xf32>
      %265 = vector.multi_reduction <add>, %264, %cst_81 [1] : vector<8x64xf32> to vector<8xf32>
      %266 = vector.shape_cast %265 : vector<8xf32> to vector<8x1xf32>
      %c0_82 = arith.constant 0 : index
      %c0_83 = arith.constant 0 : index
      %267 = vector.load %arg13[%c0_82, %c0_83] : memref<1x1xf32, #tpu.memory_space<vmem>>, vector<1x1xf32>
      %268 = vector.broadcast %267 : vector<1x1xf32> to vector<8x1xf32>
      %269 = arith.addf %266, %268 : vector<8x1xf32>
      %270 = arith.negf %269 : vector<8x1xf32>
      %271 = math.exp %270 : vector<8x1xf32>
      %cst_84 = arith.constant 1.000000e+00 : f32
      %272 = vector.broadcast %cst_84 : f32 to vector<8x1xf32>
      %273 = arith.addf %272, %271 : vector<8x1xf32>
      %274 = arith.divf %272, %273 : vector<8x1xf32>
      %c0_85 = arith.constant 0 : index
      %c0_86 = arith.constant 0 : index
      %275 = vector.load %arg14[%c0_85, %c0_86] : memref<8x1xf32, #tpu.memory_space<vmem>>, vector<8x1xf32>
      tpu.vector_store %arg14[%c0_85, %c0_86], %274 {strides = array<i32>} : memref<8x1xf32, #tpu.memory_space<vmem>>, vector<8x1xf32>,
    } else {
    }
    return
  }
  func.func @transform_0(%arg0: i32, %arg1: i32) -> (i32, i32, i32) {
    %c0_i32 = arith.constant 0 : i32
    %c0_i32_0 = arith.constant 0 : i32
    return %arg0, %arg1, %c0_i32 : i32, i32, i32
  }
  func.func @transform_1(%arg0: i32, %arg1: i32) -> (i32, i32) {
    %c0_i32 = arith.constant 0 : i32
    %c0_i32_0 = arith.constant 0 : i32
    %c0_i32_1 = arith.constant 0 : i32
    return %c0_i32, %c0_i32_0 : i32, i32
  }
  func.func @transform_2(%arg0: i32, %arg1: i32) -> (i32, i32) {
    %c0_i32 = arith.constant 0 : i32
    %c0_i32_0 = arith.constant 0 : i32
    %c0_i32_1 = arith.constant 0 : i32
    return %c0_i32, %c0_i32_0 : i32, i32
  }
  func.func @transform_3(%arg0: i32, %arg1: i32) -> (i32, i32) {
    %c0_i32 = arith.constant 0 : i32
    %c0_i32_0 = arith.constant 0 : i32
    %c0_i32_1 = arith.constant 0 : i32
    return %c0_i32, %c0_i32_0 : i32, i32
  }
  func.func @transform_4(%arg0: i32, %arg1: i32) -> (i32, i32) {
    %c0_i32 = arith.constant 0 : i32
    %c0_i32_0 = arith.constant 0 : i32
    %c0_i32_1 = arith.constant 0 : i32
    return %c0_i32, %c0_i32_0 : i32, i32
  }
  func.func @transform_5(%arg0: i32, %arg1: i32) -> (i32, i32) {
    %c0_i32 = arith.constant 0 : i32
    %c0_i32_0 = arith.constant 0 : i32
    %c0_i32_1 = arith.constant 0 : i32
    return %c0_i32, %c0_i32_0 : i32, i32
  }
  func.func @transform_6(%arg0: i32, %arg1: i32) -> (i32, i32) {
    %c0_i32 = arith.constant 0 : i32
    %c0_i32_0 = arith.constant 0 : i32
    %c0_i32_1 = arith.constant 0 : i32
    return %c0_i32, %c0_i32_0 : i32, i32
  }
  func.func @transform_7(%arg0: i32, %arg1: i32) -> (i32, i32) {
    %c0_i32 = arith.constant 0 : i32
    %c0_i32_0 = arith.constant 0 : i32
    %c0_i32_1 = arith.constant 0 : i32
    return %c0_i32, %c0_i32_0 : i32, i32
  }
  func.func @transform_8(%arg0: i32, %arg1: i32) -> (i32, i32) {
    %c0_i32 = arith.constant 0 : i32
    %c0_i32_0 = arith.constant 0 : i32
    %c0_i32_1 = arith.constant 0 : i32
    return %c0_i32, %c0_i32_0 : i32, i32
  }
  func.func @transform_9(%arg0: i32, %arg1: i32) -> (i32, i32) {
    %c0_i32 = arith.constant 0 : i32
    %c0_i32_0 = arith.constant 0 : i32
    %c0_i32_1 = arith.constant 0 : i32
    return %c0_i32, %c0_i32_0 : i32, i32
  }
  func.func @transform_10(%arg0: i32, %arg1: i32) -> (i32, i32) {
    %c0_i32 = arith.constant 0 : i32
    %c0_i32_0 = arith.constant 0 : i32
    %c0_i32_1 = arith.constant 0 : i32
    return %c0_i32, %c0_i32_0 : i32, i32
  }
  func.func @transform_11(%arg0: i32, %arg1: i32) -> (i32, i32) {
    %c0_i32 = arith.constant 0 : i32
    %c0_i32_0 = arith.constant 0 : i32
    %c0_i32_1 = arith.constant 0 : i32
    return %c0_i32, %c0_i32_0 : i32, i32
  }
  func.func @transform_12(%arg0: i32, %arg1: i32) -> (i32, i32) {
    %c0_i32 = arith.constant 0 : i32
    %c0_i32_0 = arith.constant 0 : i32
    return %arg0, %c0_i32 : i32, i32
  }
}

</mosaic_0001>

<llo_original>
// kernel: tpu_custom_call.1
$region0: #{tpu_custom_call.1}
  #allocation0 [shape = 'u32[]', space=smem, size = 0x4, offset = 0x4, fixed_abs, tag = 'smem constant byte address 0x4 - core index']
  #allocation1 [shape = 'u32[72,128]{1,0:T(1,128)}', space=vmem, size = 0x9000, scoped, tag = 'internal scratch']
  #allocation2 [shape = 'f32[8,64]{1,0:T(8,128)}', space=vmem, size = 0x1000, scoped, tag = 'scratch operand']
  #allocation3 [shape = 'f32[64,192]{1,0:T(8,128)}', space=vmem, size = 0x10000, scoped, tag = 'scratch operand']
  #allocation4 [shape = 'f32[1,1]{1,0:T(1,128)S(1)}', space=vmem, size = 0x200, scoped, tag = 'scoped memory for tpu_custom_call.1']
  %s0 = inlined_call_operand.vmem [shape: s32[1,8,8], index: 0, kind: input, shape index: {}]
  %s1 = inlined_call_operand.vmem [shape: f32[128,192], index: 1, kind: input, shape index: {}]
  %s2 = inlined_call_operand.vmem [shape: f32[64,192], index: 2, kind: input, shape index: {}]
  %s3 = inlined_call_operand.vmem [shape: f32[1,192], index: 3, kind: input, shape index: {}]
  %s4 = inlined_call_operand.hbm [shape: f32[64,256], index: 4, kind: input, shape index: {}]
  %s5 = inlined_call_operand.vmem [shape: f32[1,256], index: 5, kind: input, shape index: {}]
  %s6 = inlined_call_operand.vmem [shape: f32[256,128], index: 6, kind: input, shape index: {}]
  %s7 = inlined_call_operand.vmem [shape: f32[1,128], index: 7, kind: input, shape index: {}]
  %s8 = inlined_call_operand.vmem [shape: f32[128,64], index: 8, kind: input, shape index: {}]
  %s9 = inlined_call_operand.vmem [shape: f32[1,64], index: 9, kind: input, shape index: {}]
  %s10 = inlined_call_operand.vmem [shape: f32[1,64], index: 10, kind: input, shape index: {}]
  %s11 = inlined_call_operand.<no memory space> [shape: f32[1,1], index: 11, kind: input, shape index: {}]
  %s12 = inlined_call_operand.vmem [shape: f32[8,1], index: 12, kind: output, shape index: {}]
  %s13 = sld [smem:[#allocation0]]
  $region70: #{tpu_custom_call.1} parent=0
    _
  %s15 = ssub.s32 1, %s13
  %s16 = scalar_select 0, %s15, %s13
  %v17 = vstv %s11
  %18 = vst [vmem:[#allocation4] sm:$0x1] %v17
  $region1: #{tpu_custom_call.1} parent=0
    #allocation5 [shape = 'u8[65536]{0}', space=vmem, size = 0x10000, scoped, tag = 'input window, operand 4, single buffered']
    #allocation6 [shape = 's32[1]{0}', space=sflag, size = 0x4, scoped, tag = 'scoped memory for tpu_custom_call.1']
    %19 = vsyncpa [#allocation6], 0
    // Predicated region
    $region2: #{tpu_custom_call.1} parent=1 // pred_check
      _
    $region3: #{tpu_custom_call.1} parent=1 // pred_check_branch
      %21 = sbr.rel (0) target = $region5
    $region4: #{tpu_custom_call.1} parent=1 // pred_region
      _
    $region5: #{tpu_custom_call.1} parent=1 // pred_fallthru
      _
    // Predicated region
    $region6: #{tpu_custom_call.1} parent=1 // pred_check
      _
    $region7: #{tpu_custom_call.1} parent=1 // pred_check_branch
      %23 = sbr.rel (0) target = $region9
    $region8: #{tpu_custom_call.1} parent=1 // pred_region
      _
    $region9: #{tpu_custom_call.1} parent=1 // pred_fallthru
      _
    // Predicated region
    $region10: #{tpu_custom_call.1} parent=1 // pred_check
      _
    $region11: #{tpu_custom_call.1} parent=1 // pred_check_branch
      %25 = sbr.rel (0) target = $region13
    $region12: #{tpu_custom_call.1} parent=1 // pred_region
      _
    $region13: #{tpu_custom_call.1} parent=1 // pred_fallthru
      _
    // Predicated region
    $region14: #{tpu_custom_call.1} parent=1 // pred_check
      _
    $region15: #{tpu_custom_call.1} parent=1 // pred_check_branch
      %27 = sbr.rel (0) target = $region17
    $region16: #{tpu_custom_call.1} parent=1 // pred_region
      _
    $region17: #{tpu_custom_call.1} parent=1 // pred_fallthru
      _
    // Predicated region
    $region18: #{tpu_custom_call.1} parent=1 // pred_check
      _
    $region19: #{tpu_custom_call.1} parent=1 // pred_check_branch
      %29 = sbr.rel (0) target = $region21
    $region20: #{tpu_custom_call.1} parent=1 // pred_region
      %31 = vsyncadd [#allocation6], 0
      %s32 = sshll.u32 %s4, 4
      %s33 = int_to_ptr.hbm [resolvable:$true] %s32
      %s34 = sshll.u32 [#allocation5], 4
      %s35 = int_to_ptr.vmem [resolvable:$true] %s34
      %40 = dma.hbm_to_vmem [thread:$0]  %s33, 2048, %s35, [#allocation6], 256, 256, 16
    $region21: #{tpu_custom_call.1} parent=1 // pred_fallthru
      _
    // Predicated region
    $region22: #{tpu_custom_call.1} parent=1 // pred_check
      _
    $region23: #{tpu_custom_call.1} parent=1 // pred_check_branch
      %42 = sbr.rel (0) target = $region25
    $region24: #{tpu_custom_call.1} parent=1 // pred_region
      _
    $region25: #{tpu_custom_call.1} parent=1 // pred_fallthru
      _
    // Predicated region
    $region26: #{tpu_custom_call.1} parent=1 // pred_check
      _
    $region27: #{tpu_custom_call.1} parent=1 // pred_check_branch
      %44 = sbr.rel (0) target = $region29
    $region28: #{tpu_custom_call.1} parent=1 // pred_region
      _
    $region29: #{tpu_custom_call.1} parent=1 // pred_fallthru
      _
    // Predicated region
    $region30: #{tpu_custom_call.1} parent=1 // pred_check
      _
    $region31: #{tpu_custom_call.1} parent=1 // pred_check_branch
      %46 = sbr.rel (0) target = $region33
    $region32: #{tpu_custom_call.1} parent=1 // pred_region
      _
    $region33: #{tpu_custom_call.1} parent=1 // pred_fallthru
      _
    // Predicated region
    $region34: #{tpu_custom_call.1} parent=1 // pred_check
      _
    $region35: #{tpu_custom_call.1} parent=1 // pred_check_branch
      %48 = sbr.rel (0) target = $region37
    $region36: #{tpu_custom_call.1} parent=1 // pred_region
      _
    $region37: #{tpu_custom_call.1} parent=1 // pred_fallthru
      _
    // Predicated region
    $region38: #{tpu_custom_call.1} parent=1 // pred_check
      _
    $region39: #{tpu_custom_call.1} parent=1 // pred_check_branch
      %50 = sbr.rel (0) target = $region41
    $region40: #{tpu_custom_call.1} parent=1 // pred_region
      _
    $region41: #{tpu_custom_call.1} parent=1 // pred_fallthru
      _
    // Predicated region
    $region42: #{tpu_custom_call.1} parent=1 // pred_check
      _
    $region43: #{tpu_custom_call.1} parent=1 // pred_check_branch
      %52 = sbr.rel (0) target = $region45
    $region44: #{tpu_custom_call.1} parent=1 // pred_region
      _
    $region45: #{tpu_custom_call.1} parent=1 // pred_fallthru
      _
    // Predicated region
    $region46: #{tpu_custom_call.1} parent=1 // pred_check
      _
    $region47: #{tpu_custom_call.1} parent=1 // pred_check_branch
      %54 = sbr.rel (0) target = $region49
    $region48: #{tpu_custom_call.1} parent=1 // pred_region
      _
    $region49: #{tpu_custom_call.1} parent=1 // pred_fallthru
      _
    // Predicated region
    $region50: #{tpu_custom_call.1} parent=1 // pred_check
      _
    $region51: #{tpu_custom_call.1} parent=1 // pred_check_branch
      %56 = sbr.rel (0) target = $region53
    $region52: #{tpu_custom_call.1} parent=1 // pred_region
      %58 = dma.done [#allocation6], 2048
    $region53: #{tpu_custom_call.1} parent=1 // pred_fallthru
      _
    %p59 = scmp.eq.s32.totalorder 0, 0
    // Predicated region
    $region54: #{tpu_custom_call.1} parent=1 // pred_check
      %p60 = pneg %p59
    $region55: #{tpu_custom_call.1} parent=1 // pred_check_branch
      %62 = sbr.rel (%p60) target = $region57
    $region56: #{tpu_custom_call.1} parent=1 // pred_region
      %vm63 = vcmask 523264
      %64 = vst.msk [vmem:[#allocation2] sm:$0xff] %vm63, 0.0
    $region57: #{tpu_custom_call.1} parent=1 // pred_fallthru
      _
    %v65 = vld [vmem:[%s0] sm:$0xff]
    %v66 = vlaneseq
    %v67 = vand.u32 %v66, 127
    %v68 = vperm.slane %v65, 0
    %v69 = vlaneseq
    %v70 = vshrl.u32 %v69, 7
    %72 = vset.pattern.permute.xlu0 %v70
    %73 = vperm.xlu0 %72, %v68
    %v74 = vpop.permute.xlu0 %73
    %v75 = vperm.slane %v65, 1
    %v76 = vlaneseq
    %v77 = vshrl.u32 %v76, 7
    %79 = vset.pattern.permute.xlu0 %v77
    %80 = vperm.xlu0 %79, %v75
    %v81 = vpop.permute.xlu0 %80
    %v82 = vperm.slane %v65, 2
    %v83 = vlaneseq
    %v84 = vshrl.u32 %v83, 7
    %86 = vset.pattern.permute.xlu0 %v84
    %87 = vperm.xlu0 %86, %v82
    %v88 = vpop.permute.xlu0 %87
    %v89 = vperm.slane %v65, 3
    %v90 = vlaneseq
    %v91 = vshrl.u32 %v90, 7
    %93 = vset.pattern.permute.xlu0 %v91
    %94 = vperm.xlu0 %93, %v89
    %v95 = vpop.permute.xlu0 %94
    %v96 = vperm.slane %v65, 4
    %v97 = vlaneseq
    %v98 = vshrl.u32 %v97, 7
    %100 = vset.pattern.permute.xlu0 %v98
    %101 = vperm.xlu0 %100, %v96
    %v102 = vpop.permute.xlu0 %101
    %v103 = vperm.slane %v65, 5
    %v104 = vlaneseq
    %v105 = vshrl.u32 %v104, 7
    %107 = vset.pattern.permute.xlu0 %v105
    %108 = vperm.xlu0 %107, %v103
    %v109 = vpop.permute.xlu0 %108
    %v110 = vperm.slane %v65, 6
    %v111 = vlaneseq
    %v112 = vshrl.u32 %v111, 7
    %114 = vset.pattern.permute.xlu0 %v112
    %115 = vperm.xlu0 %114, %v110
    %v116 = vpop.permute.xlu0 %115
    %v117 = vperm.slane %v65, 7
    %v118 = vlaneseq
    %v119 = vshrl.u32 %v118, 7
    %121 = vset.pattern.permute.xlu0 %v119
    %122 = vperm.xlu0 %121, %v117
    %v123 = vpop.permute.xlu0 %122
    %vm124 = vcmp.eq.s32.totalorder %v74, %v67
    %vm125 = vcmp.eq.s32.totalorder %v81, %v67
    %vm126 = vcmp.eq.s32.totalorder %v88, %v67
    %vm127 = vcmp.eq.s32.totalorder %v95, %v67
    %vm128 = vcmp.eq.s32.totalorder %v102, %v67
    %vm129 = vcmp.eq.s32.totalorder %v109, %v67
    %vm130 = vcmp.eq.s32.totalorder %v116, %v67
    %vm131 = vcmp.eq.s32.totalorder %v123, %v67
    %v132 = vsel %vm124, 1, 0
    %v133 = vsel %vm125, 1, 0
    %v134 = vsel %vm126, 1, 0
    %v135 = vsel %vm127, 1, 0
    %v136 = vsel %vm128, 1, 0
    %v137 = vsel %vm129, 1, 0
    %v138 = vsel %vm130, 1, 0
    %v139 = vsel %vm131, 1, 0
    %v140 = vcvt.s32.f32 %v132
    %v141 = vcvt.s32.f32 %v133
    %v142 = vcvt.s32.f32 %v134
    %v143 = vcvt.s32.f32 %v135
    %v144 = vcvt.s32.f32 %v136
    %v145 = vcvt.s32.f32 %v137
    %v146 = vcvt.s32.f32 %v138
    %v147 = vcvt.s32.f32 %v139
    %v148 = vld [vmem:[%s1] sm:$0xff]
    %v149 = vld [vmem:[%s1 + $0x8] sm:$0xff]
    %v150 = vld [vmem:[%s1 + $0x10] sm:$0xff]
    %v151 = vld [vmem:[%s1 + $0x18] sm:$0xff]
    %v152 = vld [vmem:[%s1 + $0x20] sm:$0xff]
    %v153 = vld [vmem:[%s1 + $0x28] sm:$0xff]
    %v154 = vld [vmem:[%s1 + $0x30] sm:$0xff]
    %v155 = vld [vmem:[%s1 + $0x38] sm:$0xff]
    %v156 = vld [vmem:[%s1 + $0x40] sm:$0xff]
    %v157 = vld [vmem:[%s1 + $0x48] sm:$0xff]
    %v158 = vld [vmem:[%s1 + $0x50] sm:$0xff]
    %v159 = vld [vmem:[%s1 + $0x58] sm:$0xff]
    %v160 = vld [vmem:[%s1 + $0x60] sm:$0xff]
    %v161 = vld [vmem:[%s1 + $0x68] sm:$0xff]
    %v162 = vld [vmem:[%s1 + $0x70] sm:$0xff]
    %v163 = vld [vmem:[%s1 + $0x78] sm:$0xff]
    %v164 = vld [vmem:[%s1 + $0x80] sm:$0xff]
    %v165 = vld [vmem:[%s1 + $0x88] sm:$0xff]
    %v166 = vld [vmem:[%s1 + $0x90] sm:$0xff]
    %v167 = vld [vmem:[%s1 + $0x98] sm:$0xff]
    %v168 = vld [vmem:[%s1 + $0xa0] sm:$0xff]
    %v169 = vld [vmem:[%s1 + $0xa8] sm:$0xff]
    %v170 = vld [vmem:[%s1 + $0xb0] sm:$0xff]
    %v171 = vld [vmem:[%s1 + $0xb8] sm:$0xff]
    %v172 = vld [vmem:[%s1 + $0xc0] sm:$0xff]
    %v173 = vld [vmem:[%s1 + $0xc8] sm:$0xff]
    %v174 = vld [vmem:[%s1 + $0xd0] sm:$0xff]
    %v175 = vld [vmem:[%s1 + $0xd8] sm:$0xff]
    %v176 = vld [vmem:[%s1 + $0xe0] sm:$0xff]
    %v177 = vld [vmem:[%s1 + $0xe8] sm:$0xff]
    %v178 = vld [vmem:[%s1 + $0xf0] sm:$0xff]
    %v179 = vld [vmem:[%s1 + $0xf8] sm:$0xff]
    %180 = vmatpush.msra.mxu0 %v178
    %181 = vmatpush.msra.mxu0 %v176
    %182 = vmatpush.msra.mxu0 %v174
    %183 = vmatpush.msra.mxu0 %v172
    %184 = vmatpush.msra.mxu0 %v170
    %185 = vmatpush.msra.mxu0 %v168
    %186 = vmatpush.msra.mxu0 %v166
    %187 = vmatpush.msra.mxu0 %v164
    %188 = vmatpush.msra.mxu0 %v162
    %189 = vmatpush.msra.mxu0 %v160
    %190 = vmatpush.msra.mxu0 %v158
    %191 = vmatpush.msra.mxu0 %v156
    %192 = vmatpush.msra.mxu0 %v154
    %193 = vmatpush.msra.mxu0 %v152
    %194 = vmatpush.msra.mxu0 %v150
    %195 = vmatpush.msra.mxu0 %v148
    %196 = vmatmul.f32.gmra.mxu0 %v140
    %v197 = vpop.f32.mrf.mxu0
    %v198 = vadd.f32 0.0, %v197
    %199 = vmatmul.f32.gmra.mxu0 %v141
    %v200 = vpop.f32.mrf.mxu0
    %v201 = vadd.f32 0.0, %v200
    %202 = vmatmul.f32.gmra.mxu0 %v142
    %v203 = vpop.f32.mrf.mxu0
    %v204 = vadd.f32 0.0, %v203
    %205 = vmatmul.f32.gmra.mxu0 %v143
    %v206 = vpop.f32.mrf.mxu0
    %v207 = vadd.f32 0.0, %v206
    %208 = vmatmul.f32.gmra.mxu0 %v144
    %v209 = vpop.f32.mrf.mxu0
    %v210 = vadd.f32 0.0, %v209
    %211 = vmatmul.f32.gmra.mxu0 %v145
    %v212 = vpop.f32.mrf.mxu0
    %v213 = vadd.f32 0.0, %v212
    %214 = vmatmul.f32.gmra.mxu0 %v146
    %v215 = vpop.f32.mrf.mxu0
    %v216 = vadd.f32 0.0, %v215
    %217 = vmatmul.f32.gmra.mxu0 %v147
    %v218 = vpop.f32.mrf.mxu0
    %v219 = vadd.f32 0.0, %v218
    %220 = vdwg.mxu0
    %221 = vmatpush.msra.mxu0 %v179
    %222 = vmatpush.msra.mxu0 %v177
    %223 = vmatpush.msra.mxu0 %v175
    %224 = vmatpush.msra.mxu0 %v173
    %225 = vmatpush.msra.mxu0 %v171
    %226 = vmatpush.msra.mxu0 %v169
    %227 = vmatpush.msra.mxu0 %v167
    %228 = vmatpush.msra.mxu0 %v165
    %229 = vmatpush.msra.mxu0 %v163
    %230 = vmatpush.msra.mxu0 %v161
    %231 = vmatpush.msra.mxu0 %v159
    %232 = vmatpush.msra.mxu0 %v157
    %233 = vmatpush.msra.mxu0 %v155
    %234 = vmatpush.msra.mxu0 %v153
    %235 = vmatpush.msra.mxu0 %v151
    %236 = vmatpush.msra.mxu0 %v149
    %237 = vmatmul.f32.gmra.mxu0 %v140
    %v238 = vpop.f32.mrf.mxu0
    %v239 = vadd.f32 0.0, %v238
    %240 = vmatmul.f32.gmra.mxu0 %v141
    %v241 = vpop.f32.mrf.mxu0
    %v242 = vadd.f32 0.0, %v241
    %243 = vmatmul.f32.gmra.mxu0 %v142
    %v244 = vpop.f32.mrf.mxu0
    %v245 = vadd.f32 0.0, %v244
    %246 = vmatmul.f32.gmra.mxu0 %v143
    %v247 = vpop.f32.mrf.mxu0
    %v248 = vadd.f32 0.0, %v247
    %249 = vmatmul.f32.gmra.mxu0 %v144
    %v250 = vpop.f32.mrf.mxu0
    %v251 = vadd.f32 0.0, %v250
    %252 = vmatmul.f32.gmra.mxu0 %v145
    %v253 = vpop.f32.mrf.mxu0
    %v254 = vadd.f32 0.0, %v253
    %255 = vmatmul.f32.gmra.mxu0 %v146
    %v256 = vpop.f32.mrf.mxu0
    %v257 = vadd.f32 0.0, %v256
    %258 = vmatmul.f32.gmra.mxu0 %v147
    %v259 = vpop.f32.mrf.mxu0
    %v260 = vadd.f32 0.0, %v259
    %261 = vdwg.mxu0
    %262 = vst [vmem:[#allocation3] sm:$0xff] %v198
    %vm263 = vcmask 523264
    %264 = vst.msk [vmem:[#allocation3 + $0x8] sm:$0xff] %vm263, %v239
    %265 = vst [vmem:[#allocation3 + $0x10] sm:$0xff] %v201
    %266 = vst.msk [vmem:[#allocation3 + $0x18] sm:$0xff] %vm263, %v242
    %267 = vst [vmem:[#allocation3 + $0x20] sm:$0xff] %v204
    %268 = vst.msk [vmem:[#allocation3 + $0x28] sm:$0xff] %vm263, %v245
    %269 = vst [vmem:[#allocation3 + $0x30] sm:$0xff] %v207
    %270 = vst.msk [vmem:[#allocation3 + $0x38] sm:$0xff] %vm263, %v248
    %271 = vst [vmem:[#allocation3 + $0x40] sm:$0xff] %v210
    %272 = vst.msk [vmem:[#allocation3 + $0x48] sm:$0xff] %vm263, %v251
    %273 = vst [vmem:[#allocation3 + $0x50] sm:$0xff] %v213
    %274 = vst.msk [vmem:[#allocation3 + $0x58] sm:$0xff] %vm263, %v254
    %275 = vst [vmem:[#allocation3 + $0x60] sm:$0xff] %v216
    %276 = vst.msk [vmem:[#allocation3 + $0x68] sm:$0xff] %vm263, %v257
    %277 = vst [vmem:[#allocation3 + $0x70] sm:$0xff] %v219
    %278 = vst.msk [vmem:[#allocation3 + $0x78] sm:$0xff] %vm263, %v260
    %v279 = vld [vmem:[%s2] sm:$0xff]
    %v280 = vld [vmem:[%s2 + $0x8] sm:$0xff]
    %v281 = vld [vmem:[%s2 + $0x10] sm:$0xff]
    %v282 = vld [vmem:[%s2 + $0x18] sm:$0xff]
    %v283 = vld [vmem:[%s2 + $0x20] sm:$0xff]
    %v284 = vld [vmem:[%s2 + $0x28] sm:$0xff]
    %v285 = vld [vmem:[%s2 + $0x30] sm:$0xff]
    %v286 = vld [vmem:[%s2 + $0x38] sm:$0xff]
    %v287 = vld [vmem:[%s2 + $0x40] sm:$0xff]
    %v288 = vld [vmem:[%s2 + $0x48] sm:$0xff]
    %v289 = vld [vmem:[%s2 + $0x50] sm:$0xff]
    %v290 = vld [vmem:[%s2 + $0x58] sm:$0xff]
    %v291 = vld [vmem:[%s2 + $0x60] sm:$0xff]
    %v292 = vld [vmem:[%s2 + $0x68] sm:$0xff]
    %v293 = vld [vmem:[%s2 + $0x70] sm:$0xff]
    %v294 = vld [vmem:[%s2 + $0x78] sm:$0xff]
    %v295 = vld [vmem:[%s3] sm:$0x3]
    %v297 = vperm.slane %v295, 0
    %v298 = vperm.slane %v295, 1
    %v301 = vld [vmem:[#allocation2] sm:$0xff]
    %s302 = smul.u32 0, 2
    %s303 = smul.addr %s302, 8
    %s304 = scalar_lea.vmem [#allocation3], %s303
    %v305 = vld [vmem:[%s304] sm:$0xff]
    %v306 = vld [vmem:[%s304 + $0x8] sm:$0xff]
    %v308 = vsel %vm263, %v301, 0
    %310 = vmatpush.msra.mxu0 0.0
    %311 = vmatpush.msra.mxu0 0.0
    %312 = vmatpush.msra.mxu0 0.0
    %313 = vmatpush.msra.mxu0 0.0
    %314 = vmatpush.msra.mxu0 0.0
    %315 = vmatpush.msra.mxu0 0.0
    %316 = vmatpush.msra.mxu0 0.0
    %317 = vmatpush.msra.mxu0 0.0
    %318 = vmatpush.msra.mxu0 %v293
    %319 = vmatpush.msra.mxu0 %v291
    %320 = vmatpush.msra.mxu0 %v289
    %321 = vmatpush.msra.mxu0 %v287
    %322 = vmatpush.msra.mxu0 %v285
    %323 = vmatpush.msra.mxu0 %v283
    %324 = vmatpush.msra.mxu0 %v281
    %325 = vmatpush.msra.mxu0 %v279
    %326 = vmatmul.f32.gmra.mxu0 %v308
    %v327 = vpop.f32.mrf.mxu0
    %v328 = vadd.f32 %v297, %v327
    %329 = vdwg.mxu0
    %330 = vmatpush.msra.mxu0 0.0
    %331 = vmatpush.msra.mxu0 0.0
    %332 = vmatpush.msra.mxu0 0.0
    %333 = vmatpush.msra.mxu0 0.0
    %334 = vmatpush.msra.mxu0 0.0
    %335 = vmatpush.msra.mxu0 0.0
    %336 = vmatpush.msra.mxu0 0.0
    %337 = vmatpush.msra.mxu0 0.0
    %338 = vmatpush.msra.mxu0 %v294
    %339 = vmatpush.msra.mxu0 %v292
    %340 = vmatpush.msra.mxu0 %v290
    %341 = vmatpush.msra.mxu0 %v288
    %342 = vmatpush.msra.mxu0 %v286
    %343 = vmatpush.msra.mxu0 %v284
    %344 = vmatpush.msra.mxu0 %v282
    %345 = vmatpush.msra.mxu0 %v280
    %346 = vmatmul.f32.gmra.mxu0 %v308
    %v347 = vpop.f32.mrf.mxu0
    %v348 = vadd.f32 %v298, %v347
    %349 = vdwg.mxu0
    %v350 = vadd.f32 %v305, %v328
    %v351 = vxor.u32 %v350, 2147483648
    %v352 = vmul.f32 %v351, 1.442695
    %v353 = vpow.pop %v352
    %v354 = vadd.f32 %v353, 1.0
    %v355 = vrcp.pop %v354
    %v356 = vmul.f32 %v354, %v355
    %v357 = vsub.f32 1.0, %v356
    %v358 = vmul.f32 %v355, %v357
    %v359 = vadd.f32 %v355, %v358
    %vm360 = vweird.f32 %v354
    %vm361 = vweird.f32 %v355
    %vm362 = vmor %vm360, %vm361
    %v363 = vsel %vm362, %v355, %v359
    %v364 = vand.u32 2147483647, %v354
    %vm365 = vcmp.eq.f32.partialorder %v364, 8.507059e+37
    %v366 = vand.u32 %v354, 2147483648
    %v367 = vor.u32 1.1754944e-38, %v366
    %v368 = vsel %vm365, %v367, %v363
    %v369 = vmul.f32 1.0, %v368
    %v370 = vmul.f32 %v369, %v348
    %v371 = vadd.f32 %v306, %v370
    %v372 = vtanh.pop %v371
    %v373 = vsub.f32 1.0, %v369
    %375 = vrot.lane.b32.xlu0 %v372, 64
    %v376 = vpop.permute.xlu0 %375
    %v378 = vmul.f32 %v373, %v376
    %379 = vrot.lane.b32.xlu0 %v301, 64
    %v380 = vpop.permute.xlu0 %379
    %v382 = vmul.f32 %v369, %v380
    %v383 = vadd.f32 %v378, %v382
    %s384 = smul.u32 1, 2
    %s385 = smul.addr %s384, 8
    %s386 = scalar_lea.vmem [#allocation3], %s385
    %v387 = vld [vmem:[%s386] sm:$0xff]
    %v388 = vld [vmem:[%s386 + $0x8] sm:$0xff]
    %390 = vrot.lane.b32.xlu0 %v383, 64
    %v391 = vpop.permute.xlu0 %390
    %v392 = vsel %vm263, %v391, 0
    %394 = vmatpush.msra.mxu0 0.0
    %395 = vmatpush.msra.mxu0 0.0
    %396 = vmatpush.msra.mxu0 0.0
    %397 = vmatpush.msra.mxu0 0.0
    %398 = vmatpush.msra.mxu0 0.0
    %399 = vmatpush.msra.mxu0 0.0
    %400 = vmatpush.msra.mxu0 0.0
    %401 = vmatpush.msra.mxu0 0.0
    %402 = vmatpush.msra.mxu0 %v293
    %403 = vmatpush.msra.mxu0 %v291
    %404 = vmatpush.msra.mxu0 %v289
    %405 = vmatpush.msra.mxu0 %v287
    %406 = vmatpush.msra.mxu0 %v285
    %407 = vmatpush.msra.mxu0 %v283
    %408 = vmatpush.msra.mxu0 %v281
    %409 = vmatpush.msra.mxu0 %v279
    %410 = vmatmul.f32.gmra.mxu0 %v392
    %v411 = vpop.f32.mrf.mxu0
    %v412 = vadd.f32 %v297, %v411
    %413 = vdwg.mxu0
    %414 = vmatpush.msra.mxu0 0.0
    %415 = vmatpush.msra.mxu0 0.0
    %416 = vmatpush.msra.mxu0 0.0
    %417 = vmatpush.msra.mxu0 0.0
    %418 = vmatpush.msra.mxu0 0.0
    %419 = vmatpush.msra.mxu0 0.0
    %420 = vmatpush.msra.mxu0 0.0
    %421 = vmatpush.msra.mxu0 0.0
    %422 = vmatpush.msra.mxu0 %v294
    %423 = vmatpush.msra.mxu0 %v292
    %424 = vmatpush.msra.mxu0 %v290
    %425 = vmatpush.msra.mxu0 %v288
    %426 = vmatpush.msra.mxu0 %v286
    %427 = vmatpush.msra.mxu0 %v284
    %428 = vmatpush.msra.mxu0 %v282
    %429 = vmatpush.msra.mxu0 %v280
    %430 = vmatmul.f32.gmra.mxu0 %v392
    %v431 = vpop.f32.mrf.mxu0
    %v432 = vadd.f32 %v298, %v431
    %433 = vdwg.mxu0
    %v434 = vadd.f32 %v387, %v412
    %v435 = vxor.u32 %v434, 2147483648
    %v436 = vmul.f32 %v435, 1.442695
    %v437 = vpow.pop %v436
    %v438 = vadd.f32 %v437, 1.0
    %v439 = vrcp.pop %v438
    %v440 = vmul.f32 %v438, %v439
    %v441 = vsub.f32 1.0, %v440
    %v442 = vmul.f32 %v439, %v441
    %v443 = vadd.f32 %v439, %v442
    %vm444 = vweird.f32 %v438
    %vm445 = vweird.f32 %v439
    %vm446 = vmor %vm444, %vm445
    %v447 = vsel %vm446, %v439, %v443
    %v448 = vand.u32 2147483647, %v438
    %vm449 = vcmp.eq.f32.partialorder %v448, 8.507059e+37
    %v450 = vand.u32 %v438, 2147483648
    %v451 = vor.u32 1.1754944e-38, %v450
    %v452 = vsel %vm449, %v451, %v447
    %v453 = vmul.f32 1.0, %v452
    %v454 = vmul.f32 %v453, %v432
    %v455 = vadd.f32 %v388, %v454
    %v456 = vtanh.pop %v455
    %v457 = vsub.f32 1.0, %v453
    %459 = vrot.lane.b32.xlu0 %v456, 64
    %v460 = vpop.permute.xlu0 %459
    %v462 = vmul.f32 %v457, %v460
    %v463 = vmul.f32 %v453, %v383
    %v464 = vadd.f32 %v462, %v463
    %s465 = smul.u32 2, 2
    %s466 = smul.addr %s465, 8
    %s467 = scalar_lea.vmem [#allocation3], %s466
    %v468 = vld [vmem:[%s467] sm:$0xff]
    %v469 = vld [vmem:[%s467 + $0x8] sm:$0xff]
    %471 = vrot.lane.b32.xlu0 %v464, 64
    %v472 = vpop.permute.xlu0 %471
    %v473 = vsel %vm263, %v472, 0
    %475 = vmatpush.msra.mxu0 0.0
    %476 = vmatpush.msra.mxu0 0.0
    %477 = vmatpush.msra.mxu0 0.0
    %478 = vmatpush.msra.mxu0 0.0
    %479 = vmatpush.msra.mxu0 0.0
    %480 = vmatpush.msra.mxu0 0.0
    %481 = vmatpush.msra.mxu0 0.0
    %482 = vmatpush.msra.mxu0 0.0
    %483 = vmatpush.msra.mxu0 %v293
    %484 = vmatpush.msra.mxu0 %v291
    %485 = vmatpush.msra.mxu0 %v289
    %486 = vmatpush.msra.mxu0 %v287
    %487 = vmatpush.msra.mxu0 %v285
    %488 = vmatpush.msra.mxu0 %v283
    %489 = vmatpush.msra.mxu0 %v281
    %490 = vmatpush.msra.mxu0 %v279
    %491 = vmatmul.f32.gmra.mxu0 %v473
    %v492 = vpop.f32.mrf.mxu0
    %v493 = vadd.f32 %v297, %v492
    %494 = vdwg.mxu0
    %495 = vmatpush.msra.mxu0 0.0
    %496 = vmatpush.msra.mxu0 0.0
    %497 = vmatpush.msra.mxu0 0.0
    %498 = vmatpush.msra.mxu0 0.0
    %499 = vmatpush.msra.mxu0 0.0
    %500 = vmatpush.msra.mxu0 0.0
    %501 = vmatpush.msra.mxu0 0.0
    %502 = vmatpush.msra.mxu0 0.0
    %503 = vmatpush.msra.mxu0 %v294
    %504 = vmatpush.msra.mxu0 %v292
    %505 = vmatpush.msra.mxu0 %v290
    %506 = vmatpush.msra.mxu0 %v288
    %507 = vmatpush.msra.mxu0 %v286
    %508 = vmatpush.msra.mxu0 %v284
    %509 = vmatpush.msra.mxu0 %v282
    %510 = vmatpush.msra.mxu0 %v280
    %511 = vmatmul.f32.gmra.mxu0 %v473
    %v512 = vpop.f32.mrf.mxu0
    %v513 = vadd.f32 %v298, %v512
    %514 = vdwg.mxu0
    %v515 = vadd.f32 %v468, %v493
    %v516 = vxor.u32 %v515, 2147483648
    %v517 = vmul.f32 %v516, 1.442695
    %v518 = vpow.pop %v517
    %v519 = vadd.f32 %v518, 1.0
    %v520 = vrcp.pop %v519
    %v521 = vmul.f32 %v519, %v520
    %v522 = vsub.f32 1.0, %v521
    %v523 = vmul.f32 %v520, %v522
    %v524 = vadd.f32 %v520, %v523
    %vm525 = vweird.f32 %v519
    %vm526 = vweird.f32 %v520
    %vm527 = vmor %vm525, %vm526
    %v528 = vsel %vm527, %v520, %v524
    %v529 = vand.u32 2147483647, %v519
    %vm530 = vcmp.eq.f32.partialorder %v529, 8.507059e+37
    %v531 = vand.u32 %v519, 2147483648
    %v532 = vor.u32 1.1754944e-38, %v531
    %v533 = vsel %vm530, %v532, %v528
    %v534 = vmul.f32 1.0, %v533
    %v535 = vmul.f32 %v534, %v513
    %v536 = vadd.f32 %v469, %v535
    %v537 = vtanh.pop %v536
    %v538 = vsub.f32 1.0, %v534
    %540 = vrot.lane.b32.xlu0 %v537, 64
    %v541 = vpop.permute.xlu0 %540
    %v543 = vmul.f32 %v538, %v541
    %v544 = vmul.f32 %v534, %v464
    %v545 = vadd.f32 %v543, %v544
    %s546 = smul.u32 3, 2
    %s547 = smul.addr %s546, 8
    %s548 = scalar_lea.vmem [#allocation3], %s547
    %v549 = vld [vmem:[%s548] sm:$0xff]
    %v550 = vld [vmem:[%s548 + $0x8] sm:$0xff]
    %552 = vrot.lane.b32.xlu0 %v545, 64
    %v553 = vpop.permute.xlu0 %552
    %v554 = vsel %vm263, %v553, 0
    %556 = vmatpush.msra.mxu0 0.0
    %557 = vmatpush.msra.mxu0 0.0
    %558 = vmatpush.msra.mxu0 0.0
    %559 = vmatpush.msra.mxu0 0.0
    %560 = vmatpush.msra.mxu0 0.0
    %561 = vmatpush.msra.mxu0 0.0
    %562 = vmatpush.msra.mxu0 0.0
    %563 = vmatpush.msra.mxu0 0.0
    %564 = vmatpush.msra.mxu0 %v293
    %565 = vmatpush.msra.mxu0 %v291
    %566 = vmatpush.msra.mxu0 %v289
    %567 = vmatpush.msra.mxu0 %v287
    %568 = vmatpush.msra.mxu0 %v285
    %569 = vmatpush.msra.mxu0 %v283
    %570 = vmatpush.msra.mxu0 %v281
    %571 = vmatpush.msra.mxu0 %v279
    %572 = vmatmul.f32.gmra.mxu0 %v554
    %v573 = vpop.f32.mrf.mxu0
    %v574 = vadd.f32 %v297, %v573
    %575 = vdwg.mxu0
    %576 = vmatpush.msra.mxu0 0.0
    %577 = vmatpush.msra.mxu0 0.0
    %578 = vmatpush.msra.mxu0 0.0
    %579 = vmatpush.msra.mxu0 0.0
    %580 = vmatpush.msra.mxu0 0.0
    %581 = vmatpush.msra.mxu0 0.0
    %582 = vmatpush.msra.mxu0 0.0
    %583 = vmatpush.msra.mxu0 0.0
    %584 = vmatpush.msra.mxu0 %v294
    %585 = vmatpush.msra.mxu0 %v292
    %586 = vmatpush.msra.mxu0 %v290
    %587 = vmatpush.msra.mxu0 %v288
    %588 = vmatpush.msra.mxu0 %v286
    %589 = vmatpush.msra.mxu0 %v284
    %590 = vmatpush.msra.mxu0 %v282
    %591 = vmatpush.msra.mxu0 %v280
    %592 = vmatmul.f32.gmra.mxu0 %v554
    %v593 = vpop.f32.mrf.mxu0
    %v594 = vadd.f32 %v298, %v593
    %595 = vdwg.mxu0
    %v596 = vadd.f32 %v549, %v574
    %v597 = vxor.u32 %v596, 2147483648
    %v598 = vmul.f32 %v597, 1.442695
    %v599 = vpow.pop %v598
    %v600 = vadd.f32 %v599, 1.0
    %v601 = vrcp.pop %v600
    %v602 = vmul.f32 %v600, %v601
    %v603 = vsub.f32 1.0, %v602
    %v604 = vmul.f32 %v601, %v603
    %v605 = vadd.f32 %v601, %v604
    %vm606 = vweird.f32 %v600
    %vm607 = vweird.f32 %v601
    %vm608 = vmor %vm606, %vm607
    %v609 = vsel %vm608, %v601, %v605
    %v610 = vand.u32 2147483647, %v600
    %vm611 = vcmp.eq.f32.partialorder %v610, 8.507059e+37
    %v612 = vand.u32 %v600, 2147483648
    %v613 = vor.u32 1.1754944e-38, %v612
    %v614 = vsel %vm611, %v613, %v609
    %v615 = vmul.f32 1.0, %v614
    %v616 = vmul.f32 %v615, %v594
    %v617 = vadd.f32 %v550, %v616
    %v618 = vtanh.pop %v617
    %v619 = vsub.f32 1.0, %v615
    %621 = vrot.lane.b32.xlu0 %v618, 64
    %v622 = vpop.permute.xlu0 %621
    %v624 = vmul.f32 %v619, %v622
    %v625 = vmul.f32 %v615, %v545
    %v626 = vadd.f32 %v624, %v625
    %s627 = smul.u32 4, 2
    %s628 = smul.addr %s627, 8
    %s629 = scalar_lea.vmem [#allocation3], %s628
    %v630 = vld [vmem:[%s629] sm:$0xff]
    %v631 = vld [vmem:[%s629 + $0x8] sm:$0xff]
    %633 = vrot.lane.b32.xlu0 %v626, 64
    %v634 = vpop.permute.xlu0 %633
    %v635 = vsel %vm263, %v634, 0
    %637 = vmatpush.msra.mxu0 0.0
    %638 = vmatpush.msra.mxu0 0.0
    %639 = vmatpush.msra.mxu0 0.0
    %640 = vmatpush.msra.mxu0 0.0
    %641 = vmatpush.msra.mxu0 0.0
    %642 = vmatpush.msra.mxu0 0.0
    %643 = vmatpush.msra.mxu0 0.0
    %644 = vmatpush.msra.mxu0 0.0
    %645 = vmatpush.msra.mxu0 %v293
    %646 = vmatpush.msra.mxu0 %v291
    %647 = vmatpush.msra.mxu0 %v289
    %648 = vmatpush.msra.mxu0 %v287
    %649 = vmatpush.msra.mxu0 %v285
    %650 = vmatpush.msra.mxu0 %v283
    %651 = vmatpush.msra.mxu0 %v281
    %652 = vmatpush.msra.mxu0 %v279
    %653 = vmatmul.f32.gmra.mxu0 %v635
    %v654 = vpop.f32.mrf.mxu0
    %v655 = vadd.f32 %v297, %v654
    %656 = vdwg.mxu0
    %657 = vmatpush.msra.mxu0 0.0
    %658 = vmatpush.msra.mxu0 0.0
    %659 = vmatpush.msra.mxu0 0.0
    %660 = vmatpush.msra.mxu0 0.0
    %661 = vmatpush.msra.mxu0 0.0
    %662 = vmatpush.msra.mxu0 0.0
    %663 = vmatpush.msra.mxu0 0.0
    %664 = vmatpush.msra.mxu0 0.0
    %665 = vmatpush.msra.mxu0 %v294
    %666 = vmatpush.msra.mxu0 %v292
    %667 = vmatpush.msra.mxu0 %v290
    %668 = vmatpush.msra.mxu0 %v288
    %669 = vmatpush.msra.mxu0 %v286
    %670 = vmatpush.msra.mxu0 %v284
    %671 = vmatpush.msra.mxu0 %v282
    %672 = vmatpush.msra.mxu0 %v280
    %673 = vmatmul.f32.gmra.mxu0 %v635
    %v674 = vpop.f32.mrf.mxu0
    %v675 = vadd.f32 %v298, %v674
    %676 = vdwg.mxu0
    %v677 = vadd.f32 %v630, %v655
    %v678 = vxor.u32 %v677, 2147483648
    %v679 = vmul.f32 %v678, 1.442695
    %v680 = vpow.pop %v679
    %v681 = vadd.f32 %v680, 1.0
    %v682 = vrcp.pop %v681
    %v683 = vmul.f32 %v681, %v682
    %v684 = vsub.f32 1.0, %v683
    %v685 = vmul.f32 %v682, %v684
    %v686 = vadd.f32 %v682, %v685
    %vm687 = vweird.f32 %v681
    %vm688 = vweird.f32 %v682
    %vm689 = vmor %vm687, %vm688
    %v690 = vsel %vm689, %v682, %v686
    %v691 = vand.u32 2147483647, %v681
    %vm692 = vcmp.eq.f32.partialorder %v691, 8.507059e+37
    %v693 = vand.u32 %v681, 2147483648
    %v694 = vor.u32 1.1754944e-38, %v693
    %v695 = vsel %vm692, %v694, %v690
    %v696 = vmul.f32 1.0, %v695
    %v697 = vmul.f32 %v696, %v675
    %v698 = vadd.f32 %v631, %v697
    %v699 = vtanh.pop %v698
    %v700 = vsub.f32 1.0, %v696
    %702 = vrot.lane.b32.xlu0 %v699, 64
    %v703 = vpop.permute.xlu0 %702
    %v705 = vmul.f32 %v700, %v703
    %v706 = vmul.f32 %v696, %v626
    %v707 = vadd.f32 %v705, %v706
    %s708 = smul.u32 5, 2
    %s709 = smul.addr %s708, 8
    %s710 = scalar_lea.vmem [#allocation3], %s709
    %v711 = vld [vmem:[%s710] sm:$0xff]
    %v712 = vld [vmem:[%s710 + $0x8] sm:$0xff]
    %714 = vrot.lane.b32.xlu0 %v707, 64
    %v715 = vpop.permute.xlu0 %714
    %v716 = vsel %vm263, %v715, 0
    %718 = vmatpush.msra.mxu0 0.0
    %719 = vmatpush.msra.mxu0 0.0
    %720 = vmatpush.msra.mxu0 0.0
    %721 = vmatpush.msra.mxu0 0.0
    %722 = vmatpush.msra.mxu0 0.0
    %723 = vmatpush.msra.mxu0 0.0
    %724 = vmatpush.msra.mxu0 0.0
    %725 = vmatpush.msra.mxu0 0.0
    %726 = vmatpush.msra.mxu0 %v293
    %727 = vmatpush.msra.mxu0 %v291
    %728 = vmatpush.msra.mxu0 %v289
    %729 = vmatpush.msra.mxu0 %v287
    %730 = vmatpush.msra.mxu0 %v285
    %731 = vmatpush.msra.mxu0 %v283
    %732 = vmatpush.msra.mxu0 %v281
    %733 = vmatpush.msra.mxu0 %v279
    %734 = vmatmul.f32.gmra.mxu0 %v716
    %v735 = vpop.f32.mrf.mxu0
    %v736 = vadd.f32 %v297, %v735
    %737 = vdwg.mxu0
    %738 = vmatpush.msra.mxu0 0.0
    %739 = vmatpush.msra.mxu0 0.0
    %740 = vmatpush.msra.mxu0 0.0
    %741 = vmatpush.msra.mxu0 0.0
    %742 = vmatpush.msra.mxu0 0.0
    %743 = vmatpush.msra.mxu0 0.0
    %744 = vmatpush.msra.mxu0 0.0
    %745 = vmatpush.msra.mxu0 0.0
    %746 = vmatpush.msra.mxu0 %v294
    %747 = vmatpush.msra.mxu0 %v292
    %748 = vmatpush.msra.mxu0 %v290
    %749 = vmatpush.msra.mxu0 %v288
    %750 = vmatpush.msra.mxu0 %v286
    %751 = vmatpush.msra.mxu0 %v284
    %752 = vmatpush.msra.mxu0 %v282
    %753 = vmatpush.msra.mxu0 %v280
    %754 = vmatmul.f32.gmra.mxu0 %v716
    %v755 = vpop.f32.mrf.mxu0
    %v756 = vadd.f32 %v298, %v755
    %757 = vdwg.mxu0
    %v758 = vadd.f32 %v711, %v736
    %v759 = vxor.u32 %v758, 2147483648
    %v760 = vmul.f32 %v759, 1.442695
    %v761 = vpow.pop %v760
    %v762 = vadd.f32 %v761, 1.0
    %v763 = vrcp.pop %v762
    %v764 = vmul.f32 %v762, %v763
    %v765 = vsub.f32 1.0, %v764
    %v766 = vmul.f32 %v763, %v765
    %v767 = vadd.f32 %v763, %v766
    %vm768 = vweird.f32 %v762
    %vm769 = vweird.f32 %v763
    %vm770 = vmor %vm768, %vm769
    %v771 = vsel %vm770, %v763, %v767
    %v772 = vand.u32 2147483647, %v762
    %vm773 = vcmp.eq.f32.partialorder %v772, 8.507059e+37
    %v774 = vand.u32 %v762, 2147483648
    %v775 = vor.u32 1.1754944e-38, %v774
    %v776 = vsel %vm773, %v775, %v771
    %v777 = vmul.f32 1.0, %v776
    %v778 = vmul.f32 %v777, %v756
    %v779 = vadd.f32 %v712, %v778
    %v780 = vtanh.pop %v779
    %v781 = vsub.f32 1.0, %v777
    %783 = vrot.lane.b32.xlu0 %v780, 64
    %v784 = vpop.permute.xlu0 %783
    %v786 = vmul.f32 %v781, %v784
    %v787 = vmul.f32 %v777, %v707
    %v788 = vadd.f32 %v786, %v787
    %s789 = smul.u32 6, 2
    %s790 = smul.addr %s789, 8
    %s791 = scalar_lea.vmem [#allocation3], %s790
    %v792 = vld [vmem:[%s791] sm:$0xff]
    %v793 = vld [vmem:[%s791 + $0x8] sm:$0xff]
    %795 = vrot.lane.b32.xlu0 %v788, 64
    %v796 = vpop.permute.xlu0 %795
    %v797 = vsel %vm263, %v796, 0
    %799 = vmatpush.msra.mxu0 0.0
    %800 = vmatpush.msra.mxu0 0.0
    %801 = vmatpush.msra.mxu0 0.0
    %802 = vmatpush.msra.mxu0 0.0
    %803 = vmatpush.msra.mxu0 0.0
    %804 = vmatpush.msra.mxu0 0.0
    %805 = vmatpush.msra.mxu0 0.0
    %806 = vmatpush.msra.mxu0 0.0
    %807 = vmatpush.msra.mxu0 %v293
    %808 = vmatpush.msra.mxu0 %v291
    %809 = vmatpush.msra.mxu0 %v289
    %810 = vmatpush.msra.mxu0 %v287
    %811 = vmatpush.msra.mxu0 %v285
    %812 = vmatpush.msra.mxu0 %v283
    %813 = vmatpush.msra.mxu0 %v281
    %814 = vmatpush.msra.mxu0 %v279
    %815 = vmatmul.f32.gmra.mxu0 %v797
    %v816 = vpop.f32.mrf.mxu0
    %v817 = vadd.f32 %v297, %v816
    %818 = vdwg.mxu0
    %819 = vmatpush.msra.mxu0 0.0
    %820 = vmatpush.msra.mxu0 0.0
    %821 = vmatpush.msra.mxu0 0.0
    %822 = vmatpush.msra.mxu0 0.0
    %823 = vmatpush.msra.mxu0 0.0
    %824 = vmatpush.msra.mxu0 0.0
    %825 = vmatpush.msra.mxu0 0.0
    %826 = vmatpush.msra.mxu0 0.0
    %827 = vmatpush.msra.mxu0 %v294
    %828 = vmatpush.msra.mxu0 %v292
    %829 = vmatpush.msra.mxu0 %v290
    %830 = vmatpush.msra.mxu0 %v288
    %831 = vmatpush.msra.mxu0 %v286
    %832 = vmatpush.msra.mxu0 %v284
    %833 = vmatpush.msra.mxu0 %v282
    %834 = vmatpush.msra.mxu0 %v280
    %835 = vmatmul.f32.gmra.mxu0 %v797
    %v836 = vpop.f32.mrf.mxu0
    %v837 = vadd.f32 %v298, %v836
    %838 = vdwg.mxu0
    %v839 = vadd.f32 %v792, %v817
    %v840 = vxor.u32 %v839, 2147483648
    %v841 = vmul.f32 %v840, 1.442695
    %v842 = vpow.pop %v841
    %v843 = vadd.f32 %v842, 1.0
    %v844 = vrcp.pop %v843
    %v845 = vmul.f32 %v843, %v844
    %v846 = vsub.f32 1.0, %v845
    %v847 = vmul.f32 %v844, %v846
    %v848 = vadd.f32 %v844, %v847
    %vm849 = vweird.f32 %v843
    %vm850 = vweird.f32 %v844
    %vm851 = vmor %vm849, %vm850
    %v852 = vsel %vm851, %v844, %v848
    %v853 = vand.u32 2147483647, %v843
    %vm854 = vcmp.eq.f32.partialorder %v853, 8.507059e+37
    %v855 = vand.u32 %v843, 2147483648
    %v856 = vor.u32 1.1754944e-38, %v855
    %v857 = vsel %vm854, %v856, %v852
    %v858 = vmul.f32 1.0, %v857
    %v859 = vmul.f32 %v858, %v837
    %v860 = vadd.f32 %v793, %v859
    %v861 = vtanh.pop %v860
    %v862 = vsub.f32 1.0, %v858
    %864 = vrot.lane.b32.xlu0 %v861, 64
    %v865 = vpop.permute.xlu0 %864
    %v867 = vmul.f32 %v862, %v865
    %v868 = vmul.f32 %v858, %v788
    %v869 = vadd.f32 %v867, %v868
    %s870 = smul.u32 7, 2
    %s871 = smul.addr %s870, 8
    %s872 = scalar_lea.vmem [#allocation3], %s871
    %v873 = vld [vmem:[%s872] sm:$0xff]
    %v874 = vld [vmem:[%s872 + $0x8] sm:$0xff]
    %876 = vrot.lane.b32.xlu0 %v869, 64
    %v877 = vpop.permute.xlu0 %876
    %v878 = vsel %vm263, %v877, 0
    %880 = vmatpush.msra.mxu0 0.0
    %881 = vmatpush.msra.mxu0 0.0
    %882 = vmatpush.msra.mxu0 0.0
    %883 = vmatpush.msra.mxu0 0.0
    %884 = vmatpush.msra.mxu0 0.0
    %885 = vmatpush.msra.mxu0 0.0
    %886 = vmatpush.msra.mxu0 0.0
    %887 = vmatpush.msra.mxu0 0.0
    %888 = vmatpush.msra.mxu0 %v293
    %889 = vmatpush.msra.mxu0 %v291
    %890 = vmatpush.msra.mxu0 %v289
    %891 = vmatpush.msra.mxu0 %v287
    %892 = vmatpush.msra.mxu0 %v285
    %893 = vmatpush.msra.mxu0 %v283
    %894 = vmatpush.msra.mxu0 %v281
    %895 = vmatpush.msra.mxu0 %v279
    %896 = vmatmul.f32.gmra.mxu0 %v878
    %v897 = vpop.f32.mrf.mxu0
    %v898 = vadd.f32 %v297, %v897
    %899 = vdwg.mxu0
    %900 = vmatpush.msra.mxu0 0.0
    %901 = vmatpush.msra.mxu0 0.0
    %902 = vmatpush.msra.mxu0 0.0
    %903 = vmatpush.msra.mxu0 0.0
    %904 = vmatpush.msra.mxu0 0.0
    %905 = vmatpush.msra.mxu0 0.0
    %906 = vmatpush.msra.mxu0 0.0
    %907 = vmatpush.msra.mxu0 0.0
    %908 = vmatpush.msra.mxu0 %v294
    %909 = vmatpush.msra.mxu0 %v292
    %910 = vmatpush.msra.mxu0 %v290
    %911 = vmatpush.msra.mxu0 %v288
    %912 = vmatpush.msra.mxu0 %v286
    %913 = vmatpush.msra.mxu0 %v284
    %914 = vmatpush.msra.mxu0 %v282
    %915 = vmatpush.msra.mxu0 %v280
    %916 = vmatmul.f32.gmra.mxu0 %v878
    %v917 = vpop.f32.mrf.mxu0
    %v918 = vadd.f32 %v298, %v917
    %919 = vdwg.mxu0
    %v920 = vadd.f32 %v873, %v898
    %v921 = vxor.u32 %v920, 2147483648
    %v922 = vmul.f32 %v921, 1.442695
    %v923 = vpow.pop %v922
    %v924 = vadd.f32 %v923, 1.0
    %v925 = vrcp.pop %v924
    %v926 = vmul.f32 %v924, %v925
    %v927 = vsub.f32 1.0, %v926
    %v928 = vmul.f32 %v925, %v927
    %v929 = vadd.f32 %v925, %v928
    %vm930 = vweird.f32 %v924
    %vm931 = vweird.f32 %v925
    %vm932 = vmor %vm930, %vm931
    %v933 = vsel %vm932, %v925, %v929
    %v934 = vand.u32 2147483647, %v924
    %vm935 = vcmp.eq.f32.partialorder %v934, 8.507059e+37
    %v936 = vand.u32 %v924, 2147483648
    %v937 = vor.u32 1.1754944e-38, %v936
    %v938 = vsel %vm935, %v937, %v933
    %v939 = vmul.f32 1.0, %v938
    %v940 = vmul.f32 %v939, %v918
    %v941 = vadd.f32 %v874, %v940
    %v942 = vtanh.pop %v941
    %v943 = vsub.f32 1.0, %v939
    %945 = vrot.lane.b32.xlu0 %v942, 64
    %v946 = vpop.permute.xlu0 %945
    %v948 = vmul.f32 %v943, %v946
    %v949 = vmul.f32 %v939, %v869
    %v950 = vadd.f32 %v948, %v949
    %952 = vrot.lane.b32.xlu0 %v950, 64
    %v953 = vpop.permute.xlu0 %952
    %955 = vst.msk [vmem:[#allocation2] sm:$0xff] %vm263, %v953
    // Predicated region
    $region58: #{tpu_custom_call.1} parent=1 // pred_check
      %p956 = pneg %p59
    $region59: #{tpu_custom_call.1} parent=1 // pred_check_branch
      %958 = sbr.rel (%p956) target = $region61
    $region60: #{tpu_custom_call.1} parent=1 // pred_region
      %v959 = vld [vmem:[#allocation5] sm:$0xff]
      %v960 = vld [vmem:[#allocation5 + $0x8] sm:$0xff]
      %v961 = vld [vmem:[#allocation5 + $0x10] sm:$0xff]
      %v962 = vld [vmem:[#allocation5 + $0x18] sm:$0xff]
      %v963 = vld [vmem:[#allocation5 + $0x20] sm:$0xff]
      %v964 = vld [vmem:[#allocation5 + $0x28] sm:$0xff]
      %v965 = vld [vmem:[#allocation5 + $0x30] sm:$0xff]
      %v966 = vld [vmem:[#allocation5 + $0x38] sm:$0xff]
      %v967 = vld [vmem:[#allocation5 + $0x40] sm:$0xff]
      %v968 = vld [vmem:[#allocation5 + $0x48] sm:$0xff]
      %v969 = vld [vmem:[#allocation5 + $0x50] sm:$0xff]
      %v970 = vld [vmem:[#allocation5 + $0x58] sm:$0xff]
      %v971 = vld [vmem:[#allocation5 + $0x60] sm:$0xff]
      %v972 = vld [vmem:[#allocation5 + $0x68] sm:$0xff]
      %v973 = vld [vmem:[#allocation5 + $0x70] sm:$0xff]
      %v974 = vld [vmem:[#allocation5 + $0x78] sm:$0xff]
      %v975 = vld [vmem:[%s5] sm:$0x3]
      %v977 = vperm.slane %v975, 0
      %v978 = vperm.slane %v975, 1
      %v981 = vsel %vm263, %v953, 0
      %983 = vmatpush.msra.mxu0 0.0
      %984 = vmatpush.msra.mxu0 0.0
      %985 = vmatpush.msra.mxu0 0.0
      %986 = vmatpush.msra.mxu0 0.0
      %987 = vmatpush.msra.mxu0 0.0
      %988 = vmatpush.msra.mxu0 0.0
      %989 = vmatpush.msra.mxu0 0.0
      %990 = vmatpush.msra.mxu0 0.0
      %991 = vmatpush.msra.mxu0 %v973
      %992 = vmatpush.msra.mxu0 %v971
      %993 = vmatpush.msra.mxu0 %v969
      %994 = vmatpush.msra.mxu0 %v967
      %995 = vmatpush.msra.mxu0 %v965
      %996 = vmatpush.msra.mxu0 %v963
      %997 = vmatpush.msra.mxu0 %v961
      %998 = vmatpush.msra.mxu0 %v959
      %999 = vmatmul.f32.gmra.mxu0 %v981
      %v1000 = vpop.f32.mrf.mxu0
      %v1001 = vadd.f32 %v977, %v1000
      %1002 = vdwg.mxu0
      %1003 = vmatpush.msra.mxu0 0.0
      %1004 = vmatpush.msra.mxu0 0.0
      %1005 = vmatpush.msra.mxu0 0.0
      %1006 = vmatpush.msra.mxu0 0.0
      %1007 = vmatpush.msra.mxu0 0.0
      %1008 = vmatpush.msra.mxu0 0.0
      %1009 = vmatpush.msra.mxu0 0.0
      %1010 = vmatpush.msra.mxu0 0.0
      %1011 = vmatpush.msra.mxu0 %v974
      %1012 = vmatpush.msra.mxu0 %v972
      %1013 = vmatpush.msra.mxu0 %v970
      %1014 = vmatpush.msra.mxu0 %v968
      %1015 = vmatpush.msra.mxu0 %v966
      %1016 = vmatpush.msra.mxu0 %v964
      %1017 = vmatpush.msra.mxu0 %v962
      %1018 = vmatpush.msra.mxu0 %v960
      %1019 = vmatmul.f32.gmra.mxu0 %v981
      %v1020 = vpop.f32.mrf.mxu0
      %v1021 = vadd.f32 %v978, %v1020
      %1022 = vdwg.mxu0
      %vm1023 = vcmp.gt.f32.partialorder %v1001, 0.0
      %vm1024 = vcmp.gt.f32.partialorder %v1021, 0.0
      %v1025 = vmul.f32 %v1001, 0.01
      %v1026 = vmul.f32 %v1021, 0.01
      %v1027 = vsel %vm1023, %v1001, %v1025
      %v1028 = vsel %vm1024, %v1021, %v1026
      %v1029 = vld [vmem:[%s6] sm:$0xff]
      %v1030 = vld [vmem:[%s6 + $0x8] sm:$0xff]
      %v1031 = vld [vmem:[%s6 + $0x10] sm:$0xff]
      %v1032 = vld [vmem:[%s6 + $0x18] sm:$0xff]
      %v1033 = vld [vmem:[%s6 + $0x20] sm:$0xff]
      %v1034 = vld [vmem:[%s6 + $0x28] sm:$0xff]
      %v1035 = vld [vmem:[%s6 + $0x30] sm:$0xff]
      %v1036 = vld [vmem:[%s6 + $0x38] sm:$0xff]
      %v1037 = vld [vmem:[%s6 + $0x40] sm:$0xff]
      %v1038 = vld [vmem:[%s6 + $0x48] sm:$0xff]
      %v1039 = vld [vmem:[%s6 + $0x50] sm:$0xff]
      %v1040 = vld [vmem:[%s6 + $0x58] sm:$0xff]
      %v1041 = vld [vmem:[%s6 + $0x60] sm:$0xff]
      %v1042 = vld [vmem:[%s6 + $0x68] sm:$0xff]
      %v1043 = vld [vmem:[%s6 + $0x70] sm:$0xff]
      %v1044 = vld [vmem:[%s6 + $0x78] sm:$0xff]
      %v1045 = vld [vmem:[%s6 + $0x80] sm:$0xff]
      %v1046 = vld [vmem:[%s6 + $0x88] sm:$0xff]
      %v1047 = vld [vmem:[%s6 + $0x90] sm:$0xff]
      %v1048 = vld [vmem:[%s6 + $0x98] sm:$0xff]
      %v1049 = vld [vmem:[%s6 + $0xa0] sm:$0xff]
      %v1050 = vld [vmem:[%s6 + $0xa8] sm:$0xff]
      %v1051 = vld [vmem:[%s6 + $0xb0] sm:$0xff]
      %v1052 = vld [vmem:[%s6 + $0xb8] sm:$0xff]
      %v1053 = vld [vmem:[%s6 + $0xc0] sm:$0xff]
      %v1054 = vld [vmem:[%s6 + $0xc8] sm:$0xff]
      %v1055 = vld [vmem:[%s6 + $0xd0] sm:$0xff]
      %v1056 = vld [vmem:[%s6 + $0xd8] sm:$0xff]
      %v1057 = vld [vmem:[%s6 + $0xe0] sm:$0xff]
      %v1058 = vld [vmem:[%s6 + $0xe8] sm:$0xff]
      %v1059 = vld [vmem:[%s6 + $0xf0] sm:$0xff]
      %v1060 = vld [vmem:[%s6 + $0xf8] sm:$0xff]
      %v1061 = vld [vmem:[%s7] sm:$0x1]
      %v1063 = vperm.slane %v1061, 0
      %1065 = vmatpush.msra.mxu0 %v1044
      %1066 = vmatpush.msra.mxu0 %v1043
      %1067 = vmatpush.msra.mxu0 %v1042
      %1068 = vmatpush.msra.mxu0 %v1041
      %1069 = vmatpush.msra.mxu0 %v1040
      %1070 = vmatpush.msra.mxu0 %v1039
      %1071 = vmatpush.msra.mxu0 %v1038
      %1072 = vmatpush.msra.mxu0 %v1037
      %1073 = vmatpush.msra.mxu0 %v1036
      %1074 = vmatpush.msra.mxu0 %v1035
      %1075 = vmatpush.msra.mxu0 %v1034
      %1076 = vmatpush.msra.mxu0 %v1033
      %1077 = vmatpush.msra.mxu0 %v1032
      %1078 = vmatpush.msra.mxu0 %v1031
      %1079 = vmatpush.msra.mxu0 %v1030
      %1080 = vmatpush.msra.mxu0 %v1029
      %1081 = vmatmul.f32.gmra.mxu0 %v1027
      %v1082 = vpop.f32.mrf.mxu0
      %v1083 = vadd.f32 %v1063, %v1082
      %1084 = vdwg.mxu0
      %1085 = vmatpush.msra.mxu0 %v1060
      %1086 = vmatpush.msra.mxu0 %v1059
      %1087 = vmatpush.msra.mxu0 %v1058
      %1088 = vmatpush.msra.mxu0 %v1057
      %1089 = vmatpush.msra.mxu0 %v1056
      %1090 = vmatpush.msra.mxu0 %v1055
      %1091 = vmatpush.msra.mxu0 %v1054
      %1092 = vmatpush.msra.mxu0 %v1053
      %1093 = vmatpush.msra.mxu0 %v1052
      %1094 = vmatpush.msra.mxu0 %v1051
      %1095 = vmatpush.msra.mxu0 %v1050
      %1096 = vmatpush.msra.mxu0 %v1049
      %1097 = vmatpush.msra.mxu0 %v1048
      %1098 = vmatpush.msra.mxu0 %v1047
      %1099 = vmatpush.msra.mxu0 %v1046
      %1100 = vmatpush.msra.mxu0 %v1045
      %1101 = vmatmul.f32.gmra.mxu0 %v1028
      %v1102 = vpop.f32.mrf.mxu0
      %v1103 = vadd.f32 %v1083, %v1102
      %1104 = vdwg.mxu0
      %vm1105 = vcmp.gt.f32.partialorder %v1103, 0.0
      %v1106 = vmul.f32 %v1103, 0.01
      %v1107 = vsel %vm1105, %v1103, %v1106
      %v1108 = vld [vmem:[%s8] sm:$0xff]
      %v1109 = vld [vmem:[%s8 + $0x8] sm:$0xff]
      %v1110 = vld [vmem:[%s8 + $0x10] sm:$0xff]
      %v1111 = vld [vmem:[%s8 + $0x18] sm:$0xff]
      %v1112 = vld [vmem:[%s8 + $0x20] sm:$0xff]
      %v1113 = vld [vmem:[%s8 + $0x28] sm:$0xff]
      %v1114 = vld [vmem:[%s8 + $0x30] sm:$0xff]
      %v1115 = vld [vmem:[%s8 + $0x38] sm:$0xff]
      %v1116 = vld [vmem:[%s8 + $0x40] sm:$0xff]
      %v1117 = vld [vmem:[%s8 + $0x48] sm:$0xff]
      %v1118 = vld [vmem:[%s8 + $0x50] sm:$0xff]
      %v1119 = vld [vmem:[%s8 + $0x58] sm:$0xff]
      %v1120 = vld [vmem:[%s8 + $0x60] sm:$0xff]
      %v1121 = vld [vmem:[%s8 + $0x68] sm:$0xff]
      %v1122 = vld [vmem:[%s8 + $0x70] sm:$0xff]
      %v1123 = vld [vmem:[%s8 + $0x78] sm:$0xff]
      %v1124 = vld [vmem:[%s9] sm:$0x1]
      %v1126 = vperm.slane %v1124, 0
      %1128 = vmatpush.msra.mxu0 %v1123
      %1129 = vmatpush.msra.mxu0 %v1122
      %1130 = vmatpush.msra.mxu0 %v1121
      %1131 = vmatpush.msra.mxu0 %v1120
      %1132 = vmatpush.msra.mxu0 %v1119
      %1133 = vmatpush.msra.mxu0 %v1118
      %1134 = vmatpush.msra.mxu0 %v1117
      %1135 = vmatpush.msra.mxu0 %v1116
      %1136 = vmatpush.msra.mxu0 %v1115
      %1137 = vmatpush.msra.mxu0 %v1114
      %1138 = vmatpush.msra.mxu0 %v1113
      %1139 = vmatpush.msra.mxu0 %v1112
      %1140 = vmatpush.msra.mxu0 %v1111
      %1141 = vmatpush.msra.mxu0 %v1110
      %1142 = vmatpush.msra.mxu0 %v1109
      %1143 = vmatpush.msra.mxu0 %v1108
      %1144 = vmatmul.f32.gmra.mxu0 %v1107
      %v1145 = vpop.f32.mrf.mxu0
      %v1146 = vadd.f32 %v1126, %v1145
      %1147 = vdwg.mxu0
      %vm1148 = vcmp.gt.f32.partialorder %v1146, 0.0
      %v1149 = vmul.f32 %v1146, 0.01
      %v1150 = vsel %vm1148, %v1146, %v1149
      %v1151 = vld [vmem:[%s10] sm:$0x1]
      %v1153 = vperm.slane %v1151, 0
      %v1155 = vmul.f32 %v1150, %v1153
      %v1156 = vsel %vm263, %v1155, 0.0
      %1157 = vadd.xlane.f32.xlu0 %v1156
      %v1158 = vpop.xlane.xlu0 %1157
      %v1159 = vld [vmem:[#allocation4] sm:$0x1]
      %v1161 = vperm.slane %v1159, 0
      %v1163 = vadd.f32 %v1158, %v1161
      %v1164 = vxor.u32 %v1163, 2147483648
      %v1165 = vmul.f32 %v1164, 1.442695
      %v1166 = vpow.pop %v1165
      %v1167 = vadd.f32 %v1166, 1.0
      %v1168 = vrcp.pop %v1167
      %v1169 = vmul.f32 %v1167, %v1168
      %v1170 = vsub.f32 1.0, %v1169
      %v1171 = vmul.f32 %v1168, %v1170
      %v1172 = vadd.f32 %v1168, %v1171
      %vm1173 = vweird.f32 %v1167
      %vm1174 = vweird.f32 %v1168
      %vm1175 = vmor %vm1173, %vm1174
      %v1176 = vsel %vm1175, %v1168, %v1172
      %v1177 = vand.u32 2147483647, %v1167
      %vm1178 = vcmp.eq.f32.partialorder %v1177, 8.507059e+37
      %v1179 = vand.u32 %v1167, 2147483648
      %v1180 = vor.u32 1.1754944e-38, %v1179
      %v1181 = vsel %vm1178, %v1180, %v1176
      %v1182 = vmul.f32 1.0, %v1181
      %vm1183 = vcmask 7168
      %1184 = vst.msk [vmem:[%s12] sm:$0xff] %vm1183, %v1182
    $region61: #{tpu_custom_call.1} parent=1 // pred_fallthru
      _
    // Predicated region
    $region62: #{tpu_custom_call.1} parent=1 // pred_check
      _
    $region63: #{tpu_custom_call.1} parent=1 // pred_check_branch
      %1186 = sbr.rel (0) target = $region65
    $region64: #{tpu_custom_call.1} parent=1 // pred_region
      _
    $region65: #{tpu_custom_call.1} parent=1 // pred_fallthru
      _
    // Predicated region
    $region66: #{tpu_custom_call.1} parent=1 // pred_check
      _
    $region67: #{tpu_custom_call.1} parent=1 // pred_check_branch
      %1188 = sbr.rel (0) target = $region69
    $region68: #{tpu_custom_call.1} parent=1 // pred_region
      _
    $region69: #{tpu_custom_call.1} parent=1 // pred_fallthru
      _
    %1189 = vsyncpa [#allocation6], 1

</llo_original>
